<compile_context>
chip_gen: v6e
topology: v6e:2x2x1
jax: 0.10.0
libtpu: 0.0.40
codegen_flags: <defaults>
</compile_context>

<pallas_src>
import math
from functools import partial

import jax
import jax.numpy as jnp
import numpy as np
from jax.experimental import pallas as pl
from jax.experimental.pallas import tpu as pltpu

EPS_BN = 1e-5
HP = jax.lax.Precision.HIGHEST  # used only by the pure-JAX reference


# ----------------------------------------------------------------------------
# Pallas kernels
# ----------------------------------------------------------------------------
def conv_bn_relu_kernel(see_ref, seo_ref, soe_ref, soo_ref, w_ref, shift_ref,
                        o_ref, patches_ref, *, Cin, Wo, Ho):
    """One conv(3x3,s2,p1,no-bias)+BN(eval)+ReLU layer for one batch element.

    Slabs: (1, mel_parity, Cin, time_parity) -- channels on sublanes, time on
    lanes.  patches_ref: (Wo, 9*Cin, Ho) f32 scratch.  o_ref: (1, Wo, Cout, Ho).
    """
    # im2col: nine whole-slab static slices written at fixed sublane offsets
    # (no per-output-row loop, no concatenate).
    for km in range(3):                      # kernel offset along mel (W)
        cm = 1 if km == 2 else 0
        for kt in range(3):                  # kernel offset along time (H)
            ct = 1 if kt == 2 else 0
            if km % 2 == 0:
                slab = see_ref if kt % 2 == 0 else seo_ref
            else:
                slab = soe_ref if kt % 2 == 0 else soo_ref
            k = km * 3 + kt
            patches_ref[:, k * Cin:(k + 1) * Cin, :] = (
                slab[0, cm:cm + Wo, :, ct:ct + Ho])

    # Wo small matmuls: (Cout, 9*Cin) @ (9*Cin, Ho); time (big dim) on lanes,
    # so the MXU result width and the output stores are lane-dense.
    w = w_ref[...]                            # (Cout, 9*Cin) bf16, BN-folded
    shift = shift_ref[...]                    # (Cout, 1) f32
    for ow in range(Wo):
        y = jnp.dot(w, patches_ref[ow].astype(jnp.bfloat16),
                    preferred_element_type=jnp.float32)       # (Cout, Ho)
        o_ref[0, ow, :, :] = jnp.maximum(y + shift, 0.0).astype(o_ref.dtype)


def gru_fc_kernel(x_ref, wih_ref, whh_ref, bih_ref, bhh_ref, wfc_ref, bfc_ref,
                  o_ref, gi_ref, *, Bp, T, H):
    """batch_first GRU (zero initial hidden) + Linear(E, E) on the final state.

    x_ref: (T*Bp, I) time-major with batch padded to Bp (multiple of 8) rows so
    every per-step slice of the hoisted input projection is sublane-aligned.
    Hidden state is carried in registers by fori_loop (no VMEM round trip).
    """
    gi_ref[...] = jnp.dot(x_ref[...], wih_ref[...],
                          preferred_element_type=jnp.float32) + bih_ref[...]

    def step(t, h):
        off = pl.multiple_of(t * Bp, 8)
        gi = gi_ref[pl.ds(off, Bp), :]                        # (Bp, 3H)
        gh = jnp.dot(h, whh_ref[...],
                     preferred_element_type=jnp.float32) + bhh_ref[...]
        r = jax.nn.sigmoid(gi[:, :H] + gh[:, :H])
        z = jax.nn.sigmoid(gi[:, H:2 * H] + gh[:, H:2 * H])
        n = jnp.tanh(gi[:, 2 * H:] + r * gh[:, 2 * H:])
        return (1.0 - z) * n + z * h

    h = jax.lax.fori_loop(0, T, step, jnp.zeros((Bp, H), jnp.float32),
                          unroll=min(T, 4))
    o_ref[...] = jnp.dot(h, wfc_ref[...],
                         preferred_element_type=jnp.float32) + bfc_ref[...]


# ----------------------------------------------------------------------------
# JAX wrappers
# ----------------------------------------------------------------------------
def conv_bn_relu(y, Wc, gamma, beta, mean, var):
    """y: (B, mel, Cin, time) f32 -> (B, mel_out, Cout, time_out) f32."""
    B, Wm, Cin, Ht = y.shape
    Cout = Wc.shape[0]
    Wo = (Wm - 1) // 2 + 1
    Ho = (Ht - 1) // 2 + 1
    y_pad = jnp.pad(y, ((0, 0), (1, 1), (0, 0), (1, 1)))
    # mel/time parity slabs (each padded element appears exactly once -> 1x traffic).
    see = y_pad[:, 0:2 * Wo + 1:2, :, 0:2 * Ho + 1:2]   # (B, Wo+1, Cin, Ho+1)
    seo = y_pad[:, 0:2 * Wo + 1:2, :, 1:2 * Ho:2]       # (B, Wo+1, Cin, Ho)
    soe = y_pad[:, 1:2 * Wo:2, :, 0:2 * Ho + 1:2]       # (B, Wo,   Cin, Ho+1)
    soo = y_pad[:, 1:2 * Wo:2, :, 1:2 * Ho:2]           # (B, Wo,   Cin, Ho)

    inv_std = 1.0 / jnp.sqrt(var + EPS_BN)
    scale = gamma * inv_std                              # (Cout,)
    shift = (beta - mean * scale).reshape(Cout, 1).astype(jnp.float32)
    # Weight (Cout,Cin,kt,km) -> rows ordered (km,kt,ci) to match the patch
    # construction; BN scale folded; bf16 MXU operand.
    w = jnp.transpose(Wc, (3, 2, 1, 0)).reshape(9 * Cin, Cout) * scale[None, :]
    w = w.T.astype(jnp.bfloat16)                         # (Cout, 9*Cin)

    out = pl.pallas_call(
        partial(conv_bn_relu_kernel, Cin=Cin, Wo=Wo, Ho=Ho),
        out_shape=jax.ShapeDtypeStruct((B, Wo, Cout, Ho), jnp.float32),
        grid=(B,),
        in_specs=[
            pl.BlockSpec((1, Wo + 1, Cin, Ho + 1), lambda b: (b, 0, 0, 0)),
            pl.BlockSpec((1, Wo + 1, Cin, Ho), lambda b: (b, 0, 0, 0)),
            pl.BlockSpec((1, Wo, Cin, Ho + 1), lambda b: (b, 0, 0, 0)),
            pl.BlockSpec((1, Wo, Cin, Ho), lambda b: (b, 0, 0, 0)),
            pl.BlockSpec((Cout, 9 * Cin), lambda b: (0, 0)),
            pl.BlockSpec((Cout, 1), lambda b: (0, 0)),
        ],
        out_specs=pl.BlockSpec((1, Wo, Cout, Ho), lambda b: (b, 0, 0, 0)),
        scratch_shapes=[pltpu.VMEM((Wo, 9 * Cin, Ho), jnp.float32)],
        compiler_params=pltpu.CompilerParams(
            dimension_semantics=("parallel",),
            vmem_limit_bytes=32 * 1024 * 1024),
    )(see, seo, soe, soo, w, shift)
    return out


def gru_fc(seq, gru_params, fc_params):
    """seq: (B, T, I) f32 -> fc(final GRU hidden state): (B, H) f32."""
    B, T, I = seq.shape
    Wih, Whh, bih, bhh = gru_params
    Wfc, bfc = fc_params
    H = Whh.shape[1]
    Bp = ((B + 7) // 8) * 8                               # sublane-aligned batch
    x_tm = jnp.transpose(seq, (1, 0, 2))                  # (T, B, I) time-major
    x_pad = jnp.zeros((T, Bp, I), jnp.float32).at[:, :B, :].set(x_tm)
    x2 = x_pad.reshape(T * Bp, I)

    out = pl.pallas_call(
        partial(gru_fc_kernel, Bp=Bp, T=T, H=H),
        out_shape=jax.ShapeDtypeStruct((Bp, H), jnp.float32),
        in_specs=[pl.BlockSpec(memory_space=pltpu.MemorySpace.VMEM)
                  for _ in range(7)],
        out_specs=pl.BlockSpec(memory_space=pltpu.MemorySpace.VMEM),
        scratch_shapes=[pltpu.VMEM((T * Bp, 3 * H), jnp.float32)],
    )(x2, Wih.T, Whh.T, bih.reshape(1, -1), bhh.reshape(1, -1),
      Wfc.T, bfc.reshape(1, -1))
    return out[:B]


def reference_encoder_forward(x, params):
    """x: (B, n_mel_channels, Time) f32 mel spectrogram.  Returns (B, 1, E)."""
    y = x[:, :, None, :]                                  # (B, mel, C=1, time)
    for p in params["convs"]:
        y = conv_bn_relu(y, *p)
    B, Fp, E, Tp = y.shape
    # PyTorch: conv out (B,E,T',F') -> transpose(1,2) -> view(B, T', E*F')
    seq = jnp.transpose(y, (0, 3, 2, 1)).reshape(B, Tp, E * Fp)
    out = gru_fc(seq, params["gru"], params["fc"])
    return out[:, None, :]                                # (B, 1, E)


# ----------------------------------------------------------------------------
# Pure-JAX reference (f32, HIGHEST) for a correctness check of the Pallas path
# ----------------------------------------------------------------------------
def reference_forward(x, params):
    y = jnp.transpose(x, (0, 2, 1))[:, None, :, :]        # NCHW (B,1,Time,n_mel)
    for (W, gamma, beta, mean, var) in params["convs"]:
        y = jax.lax.conv_general_dilated(
            y, W, window_strides=(2, 2), padding=((1, 1), (1, 1)),
            dimension_numbers=("NCHW", "OIHW", "NCHW"), precision=HP)
        scale = gamma / jnp.sqrt(var + EPS_BN)
        shift = beta - mean * scale
        y = jnp.maximum(y * scale[None, :, None, None] + shift[None, :, None, None], 0.0)
    y = jnp.transpose(y, (0, 2, 1, 3))                    # (B, T', E, F')
    B, Tp, E, Fp = y.shape
    seq = y.reshape(B, Tp, E * Fp)
    Wih, Whh, bih, bhh = params["gru"]
    H = E
    h = jnp.zeros((B, H), jnp.float32)
    for t in range(Tp):
        gi = jnp.dot(seq[:, t, :], Wih.T, precision=HP) + bih
        gh = jnp.dot(h, Whh.T, precision=HP) + bhh
        r = jax.nn.sigmoid(gi[:, :H] + gh[:, :H])
        z = jax.nn.sigmoid(gi[:, H:2 * H] + gh[:, H:2 * H])
        n = jnp.tanh(gi[:, 2 * H:] + r * gh[:, 2 * H:])
        h = (1.0 - z) * n + z * h
    Wfc, bfc = params["fc"]
    out = jnp.dot(h, Wfc.T, precision=HP) + bfc
    return out[:, None, :]


# ----------------------------------------------------------------------------
# Deterministic parameter init (shapes as implied by the module __init__)
# ----------------------------------------------------------------------------
def init_params(key, in_channels, ref_enc_filters, token_embedding_size):
    channels = [in_channels] + list(ref_enc_filters) + [token_embedding_size]
    params = {"convs": []}
    for c_in, c_out in zip(channels[:-1], channels[1:]):
        key, k1, k2, k3, k4, k5 = jax.random.split(key, 6)
        W = jax.random.normal(k1, (c_out, c_in, 3, 3), jnp.float32) / math.sqrt(9 * c_in)
        gamma = 1.0 + 0.1 * jax.random.normal(k2, (c_out,), jnp.float32)
        beta = 0.1 * jax.random.normal(k3, (c_out,), jnp.float32)
        mean = 0.1 * jax.random.normal(k4, (c_out,), jnp.float32)
        var = 1.0 + 0.1 * jax.random.uniform(k5, (c_out,), jnp.float32)
        params["convs"].append((W, gamma, beta, mean, var))

    E = token_embedding_size
    I = 2 * E
    key, k1, k2, k3, k4, k5, k6 = jax.random.split(key, 7)
    s = 1.0 / math.sqrt(E)
    params["gru"] = (
        jax.random.uniform(k1, (3 * E, I), jnp.float32, -s, s),   # weight_ih_l0
        jax.random.uniform(k2, (3 * E, E), jnp.float32, -s, s),   # weight_hh_l0
        jax.random.uniform(k3, (3 * E,), jnp.float32, -s, s),     # bias_ih_l0
        jax.random.uniform(k4, (3 * E,), jnp.float32, -s, s),     # bias_hh_l0
    )
    params["fc"] = (
        jax.random.uniform(k5, (E, E), jnp.float32, -s, s),       # Linear weight
        jax.random.uniform(k6, (E,), jnp.float32, -s, s),         # Linear bias
    )
    return params


if __name__ == "__main__":
    # Small synthetic hparams: ref_enc_filters=[4, 8], token_embedding_size=16
    # -> 3 conv layers; n_mel=16 reduces 16->8->4->2, so the flattened conv
    # output per frame is 16*2 = 2*token_embedding_size, matching the GRU input.
    B, n_mel, T = 2, 16, 16
    token_embedding_size = 16
    ref_enc_filters = [4, 8]
    in_channels = 1

    key = jax.random.PRNGKey(0)
    key, kx = jax.random.split(key)
    x = jax.random.normal(kx, (B, n_mel, T), jnp.float32)

    params = init_params(key, in_channels, ref_enc_filters, token_embedding_size)

    out = jax.block_until_ready(reference_encoder_forward(x, params))
    assert out.shape == (B, 1, token_embedding_size)

    ref = jax.block_until_ready(reference_forward(x, params))
    # bf16 MXU operands in the conv layers + default-precision GRU dots ->
    # loosened tolerance vs the f32/HIGHEST reference.
    np.testing.assert_allclose(np.asarray(out), np.asarray(ref), rtol=4e-2, atol=2e-2)

    print("KERNEL_OK")
</pallas_src>

<mosaic_0001>
module attributes {stable_mosaic.version = 11 : i64} {
  func.func @conv_bn_relu_kernel(%arg0: i32, %arg1: memref<1x9x1x9xf32, #tpu.memory_space<vmem>>, %arg2: memref<1x9x1x8xf32, #tpu.memory_space<vmem>>, %arg3: memref<1x8x1x9xf32, #tpu.memory_space<vmem>>, %arg4: memref<1x8x1x8xf32, #tpu.memory_space<vmem>>, %arg5: memref<4x9xbf16, #tpu.memory_space<vmem>>, %arg6: memref<4x1xf32, #tpu.memory_space<vmem>>, %arg7: memref<1x8x4x8xf32, #tpu.memory_space<vmem>>, %arg8: memref<8x9x8xf32, #tpu.memory_space<vmem>>) attributes {dimension_semantics = [#tpu.dimension_semantics<parallel>], iteration_bounds = array<i64: 2>, scalar_prefetch = 0 : i64, scratch_operands = 1 : i64, tpu.core_type = #tpu.core_type<tc>, window_params = [{transform_indices = @transform_0, window_bounds = array<i64: 1, 9, 1, 9>}, {transform_indices = @transform_1, window_bounds = array<i64: 1, 9, 1, 8>}, {transform_indices = @transform_2, window_bounds = array<i64: 1, 8, 1, 9>}, {transform_indices = @transform_3, window_bounds = array<i64: 1, 8, 1, 8>}, {pipeline_mode = #tpu.pipeline_mode<synchronous>, transform_indices = @transform_4, window_bounds = array<i64: 4, 9>}, {pipeline_mode = #tpu.pipeline_mode<synchronous>, transform_indices = @transform_5, window_bounds = array<i64: 4, 1>}, {transform_indices = @transform_6, window_bounds = array<i64: 1, 8, 4, 8>}]} {
    %c0 = arith.constant 0 : index
    %c0_0 = arith.constant 0 : index
    %c0_1 = arith.constant 0 : index
    %c0_2 = arith.constant 0 : index
    %0 = vector.load %arg1[%c0, %c0_0, %c0_1, %c0_2] : memref<1x9x1x9xf32, #tpu.memory_space<vmem>>, vector<1x8x1x8xf32>
    %1 = vector.shape_cast %0 : vector<1x8x1x8xf32> to vector<8x1x8xf32>
    %c0_3 = arith.constant 0 : index
    %c0_4 = arith.constant 0 : index
    %c0_5 = arith.constant 0 : index
    %2 = vector.load %arg8[%c0_3, %c0_4, %c0_5] : memref<8x9x8xf32, #tpu.memory_space<vmem>>, vector<8x1x8xf32>
    tpu.vector_store %arg8[%c0_3, %c0_4, %c0_5], %1 {strides = array<i32>} : memref<8x9x8xf32, #tpu.memory_space<vmem>>, vector<8x1x8xf32>,
    %c0_6 = arith.constant 0 : index
    %c0_7 = arith.constant 0 : index
    %c0_8 = arith.constant 0 : index
    %c0_9 = arith.constant 0 : index
    %3 = vector.load %arg2[%c0_6, %c0_7, %c0_8, %c0_9] : memref<1x9x1x8xf32, #tpu.memory_space<vmem>>, vector<1x8x1x8xf32>
    %4 = vector.shape_cast %3 : vector<1x8x1x8xf32> to vector<8x1x8xf32>
    %c0_10 = arith.constant 0 : index
    %c1 = arith.constant 1 : index
    %c0_11 = arith.constant 0 : index
    %5 = vector.load %arg8[%c0_10, %c1, %c0_11] : memref<8x9x8xf32, #tpu.memory_space<vmem>>, vector<8x1x8xf32>
    tpu.vector_store %arg8[%c0_10, %c1, %c0_11], %4 {strides = array<i32>} : memref<8x9x8xf32, #tpu.memory_space<vmem>>, vector<8x1x8xf32>,
    %c0_12 = arith.constant 0 : index
    %c0_13 = arith.constant 0 : index
    %c0_14 = arith.constant 0 : index
    %c1_15 = arith.constant 1 : index
    %6 = vector.load %arg1[%c0_12, %c0_13, %c0_14, %c1_15] : memref<1x9x1x9xf32, #tpu.memory_space<vmem>>, vector<1x8x1x8xf32>
    %7 = vector.shape_cast %6 : vector<1x8x1x8xf32> to vector<8x1x8xf32>
    %c0_16 = arith.constant 0 : index
    %c2 = arith.constant 2 : index
    %c0_17 = arith.constant 0 : index
    %8 = vector.load %arg8[%c0_16, %c2, %c0_17] : memref<8x9x8xf32, #tpu.memory_space<vmem>>, vector<8x1x8xf32>
    tpu.vector_store %arg8[%c0_16, %c2, %c0_17], %7 {strides = array<i32>} : memref<8x9x8xf32, #tpu.memory_space<vmem>>, vector<8x1x8xf32>,
    %c0_18 = arith.constant 0 : index
    %c0_19 = arith.constant 0 : index
    %c0_20 = arith.constant 0 : index
    %c0_21 = arith.constant 0 : index
    %9 = vector.load %arg3[%c0_18, %c0_19, %c0_20, %c0_21] : memref<1x8x1x9xf32, #tpu.memory_space<vmem>>, vector<1x8x1x8xf32>
    %10 = vector.shape_cast %9 : vector<1x8x1x8xf32> to vector<8x1x8xf32>
    %c0_22 = arith.constant 0 : index
    %c3 = arith.constant 3 : index
    %c0_23 = arith.constant 0 : index
    %11 = vector.load %arg8[%c0_22, %c3, %c0_23] : memref<8x9x8xf32, #tpu.memory_space<vmem>>, vector<8x1x8xf32>
    tpu.vector_store %arg8[%c0_22, %c3, %c0_23], %10 {strides = array<i32>} : memref<8x9x8xf32, #tpu.memory_space<vmem>>, vector<8x1x8xf32>,
    %c0_24 = arith.constant 0 : index
    %c0_25 = arith.constant 0 : index
    %c0_26 = arith.constant 0 : index
    %c0_27 = arith.constant 0 : index
    %12 = vector.load %arg4[%c0_24, %c0_25, %c0_26, %c0_27] : memref<1x8x1x8xf32, #tpu.memory_space<vmem>>, vector<1x8x1x8xf32>
    %13 = vector.shape_cast %12 : vector<1x8x1x8xf32> to vector<8x1x8xf32>
    %c0_28 = arith.constant 0 : index
    %c4 = arith.constant 4 : index
    %c0_29 = arith.constant 0 : index
    %14 = vector.load %arg8[%c0_28, %c4, %c0_29] : memref<8x9x8xf32, #tpu.memory_space<vmem>>, vector<8x1x8xf32>
    tpu.vector_store %arg8[%c0_28, %c4, %c0_29], %13 {strides = array<i32>} : memref<8x9x8xf32, #tpu.memory_space<vmem>>, vector<8x1x8xf32>,
    %c0_30 = arith.constant 0 : index
    %c0_31 = arith.constant 0 : index
    %c0_32 = arith.constant 0 : index
    %c1_33 = arith.constant 1 : index
    %15 = vector.load %arg3[%c0_30, %c0_31, %c0_32, %c1_33] : memref<1x8x1x9xf32, #tpu.memory_space<vmem>>, vector<1x8x1x8xf32>
    %16 = vector.shape_cast %15 : vector<1x8x1x8xf32> to vector<8x1x8xf32>
    %c0_34 = arith.constant 0 : index
    %c5 = arith.constant 5 : index
    %c0_35 = arith.constant 0 : index
    %17 = vector.load %arg8[%c0_34, %c5, %c0_35] : memref<8x9x8xf32, #tpu.memory_space<vmem>>, vector<8x1x8xf32>
    tpu.vector_store %arg8[%c0_34, %c5, %c0_35], %16 {strides = array<i32>} : memref<8x9x8xf32, #tpu.memory_space<vmem>>, vector<8x1x8xf32>,
    %c0_36 = arith.constant 0 : index
    %c1_37 = arith.constant 1 : index
    %c0_38 = arith.constant 0 : index
    %c0_39 = arith.constant 0 : index
    %18 = vector.load %arg1[%c0_36, %c1_37, %c0_38, %c0_39] : memref<1x9x1x9xf32, #tpu.memory_space<vmem>>, vector<1x8x1x8xf32>
    %19 = vector.shape_cast %18 : vector<1x8x1x8xf32> to vector<8x1x8xf32>
    %c0_40 = arith.constant 0 : index
    %c6 = arith.constant 6 : index
    %c0_41 = arith.constant 0 : index
    %20 = vector.load %arg8[%c0_40, %c6, %c0_41] : memref<8x9x8xf32, #tpu.memory_space<vmem>>, vector<8x1x8xf32>
    tpu.vector_store %arg8[%c0_40, %c6, %c0_41], %19 {strides = array<i32>} : memref<8x9x8xf32, #tpu.memory_space<vmem>>, vector<8x1x8xf32>,
    %c0_42 = arith.constant 0 : index
    %c1_43 = arith.constant 1 : index
    %c0_44 = arith.constant 0 : index
    %c0_45 = arith.constant 0 : index
    %21 = vector.load %arg2[%c0_42, %c1_43, %c0_44, %c0_45] : memref<1x9x1x8xf32, #tpu.memory_space<vmem>>, vector<1x8x1x8xf32>
    %22 = vector.shape_cast %21 : vector<1x8x1x8xf32> to vector<8x1x8xf32>
    %c0_46 = arith.constant 0 : index
    %c7 = arith.constant 7 : index
    %c0_47 = arith.constant 0 : index
    %23 = vector.load %arg8[%c0_46, %c7, %c0_47] : memref<8x9x8xf32, #tpu.memory_space<vmem>>, vector<8x1x8xf32>
    tpu.vector_store %arg8[%c0_46, %c7, %c0_47], %22 {strides = array<i32>} : memref<8x9x8xf32, #tpu.memory_space<vmem>>, vector<8x1x8xf32>,
    %c0_48 = arith.constant 0 : index
    %c1_49 = arith.constant 1 : index
    %c0_50 = arith.constant 0 : index
    %c1_51 = arith.constant 1 : index
    %24 = vector.load %arg1[%c0_48, %c1_49, %c0_50, %c1_51] : memref<1x9x1x9xf32, #tpu.memory_space<vmem>>, vector<1x8x1x8xf32>
    %25 = vector.shape_cast %24 : vector<1x8x1x8xf32> to vector<8x1x8xf32>
    %c0_52 = arith.constant 0 : index
    %c8 = arith.constant 8 : index
    %c0_53 = arith.constant 0 : index
    %26 = vector.load %arg8[%c0_52, %c8, %c0_53] : memref<8x9x8xf32, #tpu.memory_space<vmem>>, vector<8x1x8xf32>
    tpu.vector_store %arg8[%c0_52, %c8, %c0_53], %25 {strides = array<i32>} : memref<8x9x8xf32, #tpu.memory_space<vmem>>, vector<8x1x8xf32>,
    %c0_54 = arith.constant 0 : index
    %c0_55 = arith.constant 0 : index
    %27 = vector.load %arg5[%c0_54, %c0_55] : memref<4x9xbf16, #tpu.memory_space<vmem>>, vector<4x9xbf16>
    %c0_56 = arith.constant 0 : index
    %c0_57 = arith.constant 0 : index
    %28 = vector.load %arg6[%c0_56, %c0_57] : memref<4x1xf32, #tpu.memory_space<vmem>>, vector<4x1xf32>
    %c0_58 = arith.constant 0 : index
    %c0_59 = arith.constant 0 : index
    %c0_60 = arith.constant 0 : index
    %29 = vector.load %arg8[%c0_58, %c0_59, %c0_60] : memref<8x9x8xf32, #tpu.memory_space<vmem>>, vector<1x9x8xf32>
    %30 = vector.shape_cast %29 : vector<1x9x8xf32> to vector<9x8xf32>
    %31 = arith.truncf %30 : vector<9x8xf32> to vector<9x8xbf16>
    %cst = arith.constant dense<0.000000e+00> : vector<4x8xf32>
    %32 = tpu.matmul %27, %31, %cst {dimension_numbers = #tpu.dot_dimension_numbers<[1], [0], [0], [1], [0, 0, 1, 1], [], []>} : vector<4x9xbf16>, vector<9x8xbf16>, vector<4x8xf32> -> vector<4x8xf32>
    %33 = vector.broadcast %28 : vector<4x1xf32> to vector<4x8xf32>
    %34 = arith.addf %32, %33 : vector<4x8xf32>
    %cst_61 = arith.constant 0.000000e+00 : f32
    %35 = vector.broadcast %cst_61 : f32 to vector<4x8xf32>
    %36 = arith.maximumf %34, %35 : vector<4x8xf32>
    %c0_62 = arith.constant 0 : index
    %c0_63 = arith.constant 0 : index
    %c0_64 = arith.constant 0 : index
    %c0_65 = arith.constant 0 : index
    %37 = vector.load %arg7[%c0_62, %c0_63, %c0_64, %c0_65] : memref<1x8x4x8xf32, #tpu.memory_space<vmem>>, vector<1x1x4x8xf32>
    %38 = vector.shape_cast %37 : vector<1x1x4x8xf32> to vector<4x8xf32>
    %39 = vector.shape_cast %36 : vector<4x8xf32> to vector<1x1x4x8xf32>
    tpu.vector_store %arg7[%c0_62, %c0_63, %c0_64, %c0_65], %39 {strides = array<i32>} : memref<1x8x4x8xf32, #tpu.memory_space<vmem>>, vector<1x1x4x8xf32>,
    %c1_66 = arith.constant 1 : index
    %c0_67 = arith.constant 0 : index
    %c0_68 = arith.constant 0 : index
    %40 = vector.load %arg8[%c1_66, %c0_67, %c0_68] : memref<8x9x8xf32, #tpu.memory_space<vmem>>, vector<1x9x8xf32>
    %41 = vector.shape_cast %40 : vector<1x9x8xf32> to vector<9x8xf32>
    %42 = arith.truncf %41 : vector<9x8xf32> to vector<9x8xbf16>
    %cst_69 = arith.constant dense<0.000000e+00> : vector<4x8xf32>
    %43 = tpu.matmul %27, %42, %cst_69 {dimension_numbers = #tpu.dot_dimension_numbers<[1], [0], [0], [1], [0, 0, 1, 1], [], []>} : vector<4x9xbf16>, vector<9x8xbf16>, vector<4x8xf32> -> vector<4x8xf32>
    %44 = vector.broadcast %28 : vector<4x1xf32> to vector<4x8xf32>
    %45 = arith.addf %43, %44 : vector<4x8xf32>
    %cst_70 = arith.constant 0.000000e+00 : f32
    %46 = vector.broadcast %cst_70 : f32 to vector<4x8xf32>
    %47 = arith.maximumf %45, %46 : vector<4x8xf32>
    %c0_71 = arith.constant 0 : index
    %c1_72 = arith.constant 1 : index
    %c0_73 = arith.constant 0 : index
    %c0_74 = arith.constant 0 : index
    %48 = vector.load %arg7[%c0_71, %c1_72, %c0_73, %c0_74] : memref<1x8x4x8xf32, #tpu.memory_space<vmem>>, vector<1x1x4x8xf32>
    %49 = vector.shape_cast %48 : vector<1x1x4x8xf32> to vector<4x8xf32>
    %50 = vector.shape_cast %47 : vector<4x8xf32> to vector<1x1x4x8xf32>
    tpu.vector_store %arg7[%c0_71, %c1_72, %c0_73, %c0_74], %50 {strides = array<i32>} : memref<1x8x4x8xf32, #tpu.memory_space<vmem>>, vector<1x1x4x8xf32>,
    %c2_75 = arith.constant 2 : index
    %c0_76 = arith.constant 0 : index
    %c0_77 = arith.constant 0 : index
    %51 = vector.load %arg8[%c2_75, %c0_76, %c0_77] : memref<8x9x8xf32, #tpu.memory_space<vmem>>, vector<1x9x8xf32>
    %52 = vector.shape_cast %51 : vector<1x9x8xf32> to vector<9x8xf32>
    %53 = arith.truncf %52 : vector<9x8xf32> to vector<9x8xbf16>
    %cst_78 = arith.constant dense<0.000000e+00> : vector<4x8xf32>
    %54 = tpu.matmul %27, %53, %cst_78 {dimension_numbers = #tpu.dot_dimension_numbers<[1], [0], [0], [1], [0, 0, 1, 1], [], []>} : vector<4x9xbf16>, vector<9x8xbf16>, vector<4x8xf32> -> vector<4x8xf32>
    %55 = vector.broadcast %28 : vector<4x1xf32> to vector<4x8xf32>
    %56 = arith.addf %54, %55 : vector<4x8xf32>
    %cst_79 = arith.constant 0.000000e+00 : f32
    %57 = vector.broadcast %cst_79 : f32 to vector<4x8xf32>
    %58 = arith.maximumf %56, %57 : vector<4x8xf32>
    %c0_80 = arith.constant 0 : index
    %c2_81 = arith.constant 2 : index
    %c0_82 = arith.constant 0 : index
    %c0_83 = arith.constant 0 : index
    %59 = vector.load %arg7[%c0_80, %c2_81, %c0_82, %c0_83] : memref<1x8x4x8xf32, #tpu.memory_space<vmem>>, vector<1x1x4x8xf32>
    %60 = vector.shape_cast %59 : vector<1x1x4x8xf32> to vector<4x8xf32>
    %61 = vector.shape_cast %58 : vector<4x8xf32> to vector<1x1x4x8xf32>
    tpu.vector_store %arg7[%c0_80, %c2_81, %c0_82, %c0_83], %61 {strides = array<i32>} : memref<1x8x4x8xf32, #tpu.memory_space<vmem>>, vector<1x1x4x8xf32>,
    %c3_84 = arith.constant 3 : index
    %c0_85 = arith.constant 0 : index
    %c0_86 = arith.constant 0 : index
    %62 = vector.load %arg8[%c3_84, %c0_85, %c0_86] : memref<8x9x8xf32, #tpu.memory_space<vmem>>, vector<1x9x8xf32>
    %63 = vector.shape_cast %62 : vector<1x9x8xf32> to vector<9x8xf32>
    %64 = arith.truncf %63 : vector<9x8xf32> to vector<9x8xbf16>
    %cst_87 = arith.constant dense<0.000000e+00> : vector<4x8xf32>
    %65 = tpu.matmul %27, %64, %cst_87 {dimension_numbers = #tpu.dot_dimension_numbers<[1], [0], [0], [1], [0, 0, 1, 1], [], []>} : vector<4x9xbf16>, vector<9x8xbf16>, vector<4x8xf32> -> vector<4x8xf32>
    %66 = vector.broadcast %28 : vector<4x1xf32> to vector<4x8xf32>
    %67 = arith.addf %65, %66 : vector<4x8xf32>
    %cst_88 = arith.constant 0.000000e+00 : f32
    %68 = vector.broadcast %cst_88 : f32 to vector<4x8xf32>
    %69 = arith.maximumf %67, %68 : vector<4x8xf32>
    %c0_89 = arith.constant 0 : index
    %c3_90 = arith.constant 3 : index
    %c0_91 = arith.constant 0 : index
    %c0_92 = arith.constant 0 : index
    %70 = vector.load %arg7[%c0_89, %c3_90, %c0_91, %c0_92] : memref<1x8x4x8xf32, #tpu.memory_space<vmem>>, vector<1x1x4x8xf32>
    %71 = vector.shape_cast %70 : vector<1x1x4x8xf32> to vector<4x8xf32>
    %72 = vector.shape_cast %69 : vector<4x8xf32> to vector<1x1x4x8xf32>
    tpu.vector_store %arg7[%c0_89, %c3_90, %c0_91, %c0_92], %72 {strides = array<i32>} : memref<1x8x4x8xf32, #tpu.memory_space<vmem>>, vector<1x1x4x8xf32>,
    %c4_93 = arith.constant 4 : index
    %c0_94 = arith.constant 0 : index
    %c0_95 = arith.constant 0 : index
    %73 = vector.load %arg8[%c4_93, %c0_94, %c0_95] : memref<8x9x8xf32, #tpu.memory_space<vmem>>, vector<1x9x8xf32>
    %74 = vector.shape_cast %73 : vector<1x9x8xf32> to vector<9x8xf32>
    %75 = arith.truncf %74 : vector<9x8xf32> to vector<9x8xbf16>
    %cst_96 = arith.constant dense<0.000000e+00> : vector<4x8xf32>
    %76 = tpu.matmul %27, %75, %cst_96 {dimension_numbers = #tpu.dot_dimension_numbers<[1], [0], [0], [1], [0, 0, 1, 1], [], []>} : vector<4x9xbf16>, vector<9x8xbf16>, vector<4x8xf32> -> vector<4x8xf32>
    %77 = vector.broadcast %28 : vector<4x1xf32> to vector<4x8xf32>
    %78 = arith.addf %76, %77 : vector<4x8xf32>
    %cst_97 = arith.constant 0.000000e+00 : f32
    %79 = vector.broadcast %cst_97 : f32 to vector<4x8xf32>
    %80 = arith.maximumf %78, %79 : vector<4x8xf32>
    %c0_98 = arith.constant 0 : index
    %c4_99 = arith.constant 4 : index
    %c0_100 = arith.constant 0 : index
    %c0_101 = arith.constant 0 : index
    %81 = vector.load %arg7[%c0_98, %c4_99, %c0_100, %c0_101] : memref<1x8x4x8xf32, #tpu.memory_space<vmem>>, vector<1x1x4x8xf32>
    %82 = vector.shape_cast %81 : vector<1x1x4x8xf32> to vector<4x8xf32>
    %83 = vector.shape_cast %80 : vector<4x8xf32> to vector<1x1x4x8xf32>
    tpu.vector_store %arg7[%c0_98, %c4_99, %c0_100, %c0_101], %83 {strides = array<i32>} : memref<1x8x4x8xf32, #tpu.memory_space<vmem>>, vector<1x1x4x8xf32>,
    %c5_102 = arith.constant 5 : index
    %c0_103 = arith.constant 0 : index
    %c0_104 = arith.constant 0 : index
    %84 = vector.load %arg8[%c5_102, %c0_103, %c0_104] : memref<8x9x8xf32, #tpu.memory_space<vmem>>, vector<1x9x8xf32>
    %85 = vector.shape_cast %84 : vector<1x9x8xf32> to vector<9x8xf32>
    %86 = arith.truncf %85 : vector<9x8xf32> to vector<9x8xbf16>
    %cst_105 = arith.constant dense<0.000000e+00> : vector<4x8xf32>
    %87 = tpu.matmul %27, %86, %cst_105 {dimension_numbers = #tpu.dot_dimension_numbers<[1], [0], [0], [1], [0, 0, 1, 1], [], []>} : vector<4x9xbf16>, vector<9x8xbf16>, vector<4x8xf32> -> vector<4x8xf32>
    %88 = vector.broadcast %28 : vector<4x1xf32> to vector<4x8xf32>
    %89 = arith.addf %87, %88 : vector<4x8xf32>
    %cst_106 = arith.constant 0.000000e+00 : f32
    %90 = vector.broadcast %cst_106 : f32 to vector<4x8xf32>
    %91 = arith.maximumf %89, %90 : vector<4x8xf32>
    %c0_107 = arith.constant 0 : index
    %c5_108 = arith.constant 5 : index
    %c0_109 = arith.constant 0 : index
    %c0_110 = arith.constant 0 : index
    %92 = vector.load %arg7[%c0_107, %c5_108, %c0_109, %c0_110] : memref<1x8x4x8xf32, #tpu.memory_space<vmem>>, vector<1x1x4x8xf32>
    %93 = vector.shape_cast %92 : vector<1x1x4x8xf32> to vector<4x8xf32>
    %94 = vector.shape_cast %91 : vector<4x8xf32> to vector<1x1x4x8xf32>
    tpu.vector_store %arg7[%c0_107, %c5_108, %c0_109, %c0_110], %94 {strides = array<i32>} : memref<1x8x4x8xf32, #tpu.memory_space<vmem>>, vector<1x1x4x8xf32>,
    %c6_111 = arith.constant 6 : index
    %c0_112 = arith.constant 0 : index
    %c0_113 = arith.constant 0 : index
    %95 = vector.load %arg8[%c6_111, %c0_112, %c0_113] : memref<8x9x8xf32, #tpu.memory_space<vmem>>, vector<1x9x8xf32>
    %96 = vector.shape_cast %95 : vector<1x9x8xf32> to vector<9x8xf32>
    %97 = arith.truncf %96 : vector<9x8xf32> to vector<9x8xbf16>
    %cst_114 = arith.constant dense<0.000000e+00> : vector<4x8xf32>
    %98 = tpu.matmul %27, %97, %cst_114 {dimension_numbers = #tpu.dot_dimension_numbers<[1], [0], [0], [1], [0, 0, 1, 1], [], []>} : vector<4x9xbf16>, vector<9x8xbf16>, vector<4x8xf32> -> vector<4x8xf32>
    %99 = vector.broadcast %28 : vector<4x1xf32> to vector<4x8xf32>
    %100 = arith.addf %98, %99 : vector<4x8xf32>
    %cst_115 = arith.constant 0.000000e+00 : f32
    %101 = vector.broadcast %cst_115 : f32 to vector<4x8xf32>
    %102 = arith.maximumf %100, %101 : vector<4x8xf32>
    %c0_116 = arith.constant 0 : index
    %c6_117 = arith.constant 6 : index
    %c0_118 = arith.constant 0 : index
    %c0_119 = arith.constant 0 : index
    %103 = vector.load %arg7[%c0_116, %c6_117, %c0_118, %c0_119] : memref<1x8x4x8xf32, #tpu.memory_space<vmem>>, vector<1x1x4x8xf32>
    %104 = vector.shape_cast %103 : vector<1x1x4x8xf32> to vector<4x8xf32>
    %105 = vector.shape_cast %102 : vector<4x8xf32> to vector<1x1x4x8xf32>
    tpu.vector_store %arg7[%c0_116, %c6_117, %c0_118, %c0_119], %105 {strides = array<i32>} : memref<1x8x4x8xf32, #tpu.memory_space<vmem>>, vector<1x1x4x8xf32>,
    %c7_120 = arith.constant 7 : index
    %c0_121 = arith.constant 0 : index
    %c0_122 = arith.constant 0 : index
    %106 = vector.load %arg8[%c7_120, %c0_121, %c0_122] : memref<8x9x8xf32, #tpu.memory_space<vmem>>, vector<1x9x8xf32>
    %107 = vector.shape_cast %106 : vector<1x9x8xf32> to vector<9x8xf32>
    %108 = arith.truncf %107 : vector<9x8xf32> to vector<9x8xbf16>
    %cst_123 = arith.constant dense<0.000000e+00> : vector<4x8xf32>
    %109 = tpu.matmul %27, %108, %cst_123 {dimension_numbers = #tpu.dot_dimension_numbers<[1], [0], [0], [1], [0, 0, 1, 1], [], []>} : vector<4x9xbf16>, vector<9x8xbf16>, vector<4x8xf32> -> vector<4x8xf32>
    %110 = vector.broadcast %28 : vector<4x1xf32> to vector<4x8xf32>
    %111 = arith.addf %109, %110 : vector<4x8xf32>
    %cst_124 = arith.constant 0.000000e+00 : f32
    %112 = vector.broadcast %cst_124 : f32 to vector<4x8xf32>
    %113 = arith.maximumf %111, %112 : vector<4x8xf32>
    %c0_125 = arith.constant 0 : index
    %c7_126 = arith.constant 7 : index
    %c0_127 = arith.constant 0 : index
    %c0_128 = arith.constant 0 : index
    %114 = vector.load %arg7[%c0_125, %c7_126, %c0_127, %c0_128] : memref<1x8x4x8xf32, #tpu.memory_space<vmem>>, vector<1x1x4x8xf32>
    %115 = vector.shape_cast %114 : vector<1x1x4x8xf32> to vector<4x8xf32>
    %116 = vector.shape_cast %113 : vector<4x8xf32> to vector<1x1x4x8xf32>
    tpu.vector_store %arg7[%c0_125, %c7_126, %c0_127, %c0_128], %116 {strides = array<i32>} : memref<1x8x4x8xf32, #tpu.memory_space<vmem>>, vector<1x1x4x8xf32>,
    return
  }
  func.func @transform_0(%arg0: i32) -> (i32, i32, i32, i32) {
    %c0_i32 = arith.constant 0 : i32
    %c0_i32_0 = arith.constant 0 : i32
    %c0_i32_1 = arith.constant 0 : i32
    %c0_i32_2 = arith.constant 0 : i32
    return %arg0, %c0_i32, %c0_i32_0, %c0_i32_1 : i32, i32, i32, i32
  }
  func.func @transform_1(%arg0: i32) -> (i32, i32, i32, i32) {
    %c0_i32 = arith.constant 0 : i32
    %c0_i32_0 = arith.constant 0 : i32
    %c0_i32_1 = arith.constant 0 : i32
    %c0_i32_2 = arith.constant 0 : i32
    return %arg0, %c0_i32, %c0_i32_0, %c0_i32_1 : i32, i32, i32, i32
  }
  func.func @transform_2(%arg0: i32) -> (i32, i32, i32, i32) {
    %c0_i32 = arith.constant 0 : i32
    %c0_i32_0 = arith.constant 0 : i32
    %c0_i32_1 = arith.constant 0 : i32
    %c0_i32_2 = arith.constant 0 : i32
    return %arg0, %c0_i32, %c0_i32_0, %c0_i32_1 : i32, i32, i32, i32
  }
  func.func @transform_3(%arg0: i32) -> (i32, i32, i32, i32) {
    %c0_i32 = arith.constant 0 : i32
    %c0_i32_0 = arith.constant 0 : i32
    %c0_i32_1 = arith.constant 0 : i32
    %c0_i32_2 = arith.constant 0 : i32
    return %arg0, %c0_i32, %c0_i32_0, %c0_i32_1 : i32, i32, i32, i32
  }
  func.func @transform_4(%arg0: i32) -> (i32, i32) {
    %c0_i32 = arith.constant 0 : i32
    %c0_i32_0 = arith.constant 0 : i32
    %c0_i32_1 = arith.constant 0 : i32
    return %c0_i32, %c0_i32_0 : i32, i32
  }
  func.func @transform_5(%arg0: i32) -> (i32, i32) {
    %c0_i32 = arith.constant 0 : i32
    %c0_i32_0 = arith.constant 0 : i32
    %c0_i32_1 = arith.constant 0 : i32
    return %c0_i32, %c0_i32_0 : i32, i32
  }
  func.func @transform_6(%arg0: i32) -> (i32, i32, i32, i32) {
    %c0_i32 = arith.constant 0 : i32
    %c0_i32_0 = arith.constant 0 : i32
    %c0_i32_1 = arith.constant 0 : i32
    %c0_i32_2 = arith.constant 0 : i32
    return %arg0, %c0_i32, %c0_i32_0, %c0_i32_1 : i32, i32, i32, i32
  }
}

</mosaic_0001>

<llo_original>
// kernel: tpu_custom_call.1
$region0: #{tpu_custom_call.1}
  #allocation0 [shape = 'u32[]', space=smem, size = 0x4, offset = 0x4, fixed_abs, tag = 'smem constant byte address 0x4 - core index']
  #allocation1 [shape = 'u32[144,128]{1,0:T(1,128)}', space=vmem, size = 0x12000, scoped, tag = 'internal scratch']
  #allocation2 [shape = 'f32[8,9,8]{2,1,0:T(8,128)}', space=vmem, size = 0x10000, scoped, tag = 'scratch operand']
  %s0 = inlined_call_operand.vmem [shape: f32[2,9,1,9], index: 0, kind: input, shape index: {}]
  %s1 = inlined_call_operand.vmem [shape: f32[2,9,1,8], index: 1, kind: input, shape index: {}]
  %s2 = inlined_call_operand.vmem [shape: f32[2,8,1,9], index: 2, kind: input, shape index: {}]
  %s3 = inlined_call_operand.hbm [shape: f32[2,8,1,8], index: 3, kind: input, shape index: {}]
  %s4 = inlined_call_operand.vmem [shape: bf16[4,9], index: 4, kind: input, shape index: {}]
  %s5 = inlined_call_operand.vmem [shape: f32[4,1], index: 5, kind: input, shape index: {}]
  %s6 = inlined_call_operand.hbm [shape: f32[2,8,4,8], index: 6, kind: output, shape index: {}]
  %s7 = sld [smem:[#allocation0]]
  $region61: #{tpu_custom_call.1} parent=0
    _
  %s9 = ssub.s32 1, %s7
  %s10 = scalar_select 0, %s9, %s7
  $region1: #{tpu_custom_call.1} parent=0
    #allocation3 [shape = 'u8[8192]{0}', space=vmem, size = 0x2000, scoped, tag = 'input window, operand 3']
    #allocation4 [shape = 's32[2]{0}', space=sflag, size = 0x8, scoped, tag = 'scoped memory for tpu_custom_call.1']
    #allocation5 [shape = 's32[2]{0}', space=sflag, size = 0x8, scoped, tag = 'scoped memory for tpu_custom_call.1']
    #allocation6 [shape = 'u8[32768]{0}', space=vmem, size = 0x8000, scoped, tag = 'output window, operand 0']
    %11 = vsyncpa [#allocation4], 0
    %s12 = scalar_lea.sflag [#allocation4], 1
    %13 = vsyncpa %s12, 0
    %14 = vsyncpa [#allocation5], 0
    %s15 = scalar_lea.sflag [#allocation5], 1
    %16 = vsyncpa %s15, 0
    loop: start=0, step=1, limit=4
    $region2: #{tpu_custom_call.1} parent=1 // loop_pre_header
      _
    $region3: #{tpu_custom_call.1} parent=1 // loop_header
      %s18 = sphi 0, %s22
      %p19 = scmp.ge.s32.totalorder %s18, 4
      %s28 = sphi 0, %s30
      %s31 = sphi 0, %s28
      %s32 = sphi 0, %s31
      %s48 = sphi 0, %s32
      %s54 = sphi 0, %s56
      %s57 = sphi 0, %s54
      %s58 = sphi 0, %s57
      %s74 = sphi 0, %s58
      %s80 = sphi 0, %s82
      %s83 = sphi 0, %s80
      %s84 = sphi 0, %s83
      %s100 = sphi 0, %s84
      %s106 = sphi 0, %s108
      %s109 = sphi 0, %s106
      %s110 = sphi 0, %s109
      %s126 = sphi 0, %s110
      %s130 = sphi 0, %s130
      %s132 = sphi 0, %s130
      %s133 = sphi 0, %s132
      %s147 = sphi 0, %s133
      %s151 = sphi 0, %s151
      %s153 = sphi 0, %s151
      %s154 = sphi 0, %s153
      %s168 = sphi 0, %s154
      %s174 = sphi 0, %s176
      %s177 = sphi 0, %s174
      %s178 = sphi 0, %s177
      %s194 = sphi 0, %s178
    $region4: #{tpu_custom_call.1} parent=1 // loop_header_branch
      %21 = sbr.rel (%p19) target = $region8
    $region5: #{tpu_custom_call.1} parent=1 // loop_body
      %s23 = ssub.s32 %s18, 1
      %s24 = ssub.s32 %s18, 2
      %s25 = sadd.s32 %s18, 1
      %s26 = ssub.s32 %s18, %s25
      %p27 = scmp.eq.s32.totalorder %s26, 0
      %s29 = sadd.s32 %s28, 1
      %s30 = scalar_select %p27, %s28, %s29
      %p33 = pneg %p27
      %p34 = scmp.eq.s32.totalorder %s18, 1
      %p35 = por %p33, %p34
      %p36 = scmp.ne.s32.totalorder %s28, %s31
      %p37 = scmp.eq.s32.totalorder %s18, 0
      %p38 = por %p36, %p37
      %p39 = scmp.ne.s32.totalorder %s28, %s31
      %p40 = scmp.eq.s32.totalorder %s23, 1
      %p41 = por %p39, %p40
      %p42 = scmp.ne.s32.totalorder %s31, %s32
      %p43 = scmp.eq.s32.totalorder %s23, 0
      %p44 = por %p42, %p43
      %p45 = scmp.ne.s32.totalorder %s31, %s32
      %p46 = scmp.eq.s32.totalorder %s24, 1
      %p47 = por %p45, %p46
      %p49 = scmp.ne.s32.totalorder %s32, %s48
      %p50 = scmp.eq.s32.totalorder %s24, 0
      %p51 = por %p49, %p50
      %s52 = ssub.s32 %s18, %s25
      %p53 = scmp.eq.s32.totalorder %s52, 0
      %s55 = sadd.s32 %s54, 1
      %s56 = scalar_select %p53, %s54, %s55
      %p59 = pneg %p53
      %p60 = scmp.eq.s32.totalorder %s18, 1
      %p61 = por %p59, %p60
      %p62 = scmp.ne.s32.totalorder %s54, %s57
      %p63 = scmp.eq.s32.totalorder %s18, 0
      %p64 = por %p62, %p63
      %p65 = scmp.ne.s32.totalorder %s54, %s57
      %p66 = scmp.eq.s32.totalorder %s23, 1
      %p67 = por %p65, %p66
      %p68 = scmp.ne.s32.totalorder %s57, %s58
      %p69 = scmp.eq.s32.totalorder %s23, 0
      %p70 = por %p68, %p69
      %p71 = scmp.ne.s32.totalorder %s57, %s58
      %p72 = scmp.eq.s32.totalorder %s24, 1
      %p73 = por %p71, %p72
      %p75 = scmp.ne.s32.totalorder %s58, %s74
      %p76 = scmp.eq.s32.totalorder %s24, 0
      %p77 = por %p75, %p76
      %s78 = ssub.s32 %s18, %s25
      %p79 = scmp.eq.s32.totalorder %s78, 0
      %s81 = sadd.s32 %s80, 1
      %s82 = scalar_select %p79, %s80, %s81
      %p85 = pneg %p79
      %p86 = scmp.eq.s32.totalorder %s18, 1
      %p87 = por %p85, %p86
      %p88 = scmp.ne.s32.totalorder %s80, %s83
      %p89 = scmp.eq.s32.totalorder %s18, 0
      %p90 = por %p88, %p89
      %p91 = scmp.ne.s32.totalorder %s80, %s83
      %p92 = scmp.eq.s32.totalorder %s23, 1
      %p93 = por %p91, %p92
      %p94 = scmp.ne.s32.totalorder %s83, %s84
      %p95 = scmp.eq.s32.totalorder %s23, 0
      %p96 = por %p94, %p95
      %p97 = scmp.ne.s32.totalorder %s83, %s84
      %p98 = scmp.eq.s32.totalorder %s24, 1
      %p99 = por %p97, %p98
      %p101 = scmp.ne.s32.totalorder %s84, %s100
      %p102 = scmp.eq.s32.totalorder %s24, 0
      %p103 = por %p101, %p102
      %s104 = ssub.s32 %s18, %s25
      %p105 = scmp.eq.s32.totalorder %s104, 0
      %s107 = sadd.s32 %s106, 1
      %s108 = scalar_select %p105, %s106, %s107
      %p111 = pneg %p105
      %p112 = scmp.eq.s32.totalorder %s18, 1
      %p113 = por %p111, %p112
      %p114 = scmp.ne.s32.totalorder %s106, %s109
      %p115 = scmp.eq.s32.totalorder %s18, 0
      %p116 = por %p114, %p115
      %p117 = scmp.ne.s32.totalorder %s106, %s109
      %p118 = scmp.eq.s32.totalorder %s23, 1
      %p119 = por %p117, %p118
      %p120 = scmp.ne.s32.totalorder %s109, %s110
      %p121 = scmp.eq.s32.totalorder %s23, 0
      %p122 = por %p120, %p121
      %p123 = scmp.ne.s32.totalorder %s109, %s110
      %p124 = scmp.eq.s32.totalorder %s24, 1
      %p125 = por %p123, %p124
      %p127 = scmp.ne.s32.totalorder %s110, %s126
      %p128 = scmp.eq.s32.totalorder %s24, 0
      %p129 = por %p127, %p128
      %s131 = sadd.s32 %s130, 1
      %p134 = scmp.eq.s32.totalorder %s18, 1
      %p135 = scmp.ne.s32.totalorder %s130, %s132
      %p136 = scmp.eq.s32.totalorder %s18, 0
      %p137 = por %p135, %p136
      %p138 = scmp.ne.s32.totalorder %s130, %s132
      %p139 = scmp.eq.s32.totalorder %s23, 1
      %p140 = por %p138, %p139
      %p141 = scmp.ne.s32.totalorder %s132, %s133
      %p142 = scmp.eq.s32.totalorder %s23, 0
      %p143 = por %p141, %p142
      %p144 = scmp.ne.s32.totalorder %s132, %s133
      %p145 = scmp.eq.s32.totalorder %s24, 1
      %p146 = por %p144, %p145
      %p148 = scmp.ne.s32.totalorder %s133, %s147
      %p149 = scmp.eq.s32.totalorder %s24, 0
      %p150 = por %p148, %p149
      %s152 = sadd.s32 %s151, 1
      %p155 = scmp.eq.s32.totalorder %s18, 1
      %p156 = scmp.ne.s32.totalorder %s151, %s153
      %p157 = scmp.eq.s32.totalorder %s18, 0
      %p158 = por %p156, %p157
      %p159 = scmp.ne.s32.totalorder %s151, %s153
      %p160 = scmp.eq.s32.totalorder %s23, 1
      %p161 = por %p159, %p160
      %p162 = scmp.ne.s32.totalorder %s153, %s154
      %p163 = scmp.eq.s32.totalorder %s23, 0
      %p164 = por %p162, %p163
      %p165 = scmp.ne.s32.totalorder %s153, %s154
      %p166 = scmp.eq.s32.totalorder %s24, 1
      %p167 = por %p165, %p166
      %p169 = scmp.ne.s32.totalorder %s154, %s168
      %p170 = scmp.eq.s32.totalorder %s24, 0
      %p171 = por %p169, %p170
      %s172 = ssub.s32 %s18, %s25
      %p173 = scmp.eq.s32.totalorder %s172, 0
      %s175 = sadd.s32 %s174, 1
      %s176 = scalar_select %p173, %s174, %s175
      %p179 = pneg %p173
      %p180 = scmp.eq.s32.totalorder %s18, 1
      %p181 = por %p179, %p180
      %p182 = scmp.ne.s32.totalorder %s174, %s177
      %p183 = scmp.eq.s32.totalorder %s18, 0
      %p184 = por %p182, %p183
      %p185 = scmp.ne.s32.totalorder %s174, %s177
      %p186 = scmp.eq.s32.totalorder %s23, 1
      %p187 = por %p185, %p186
      %p188 = scmp.ne.s32.totalorder %s177, %s178
      %p189 = scmp.eq.s32.totalorder %s23, 0
      %p190 = por %p188, %p189
      %p191 = scmp.ne.s32.totalorder %s177, %s178
      %p192 = scmp.eq.s32.totalorder %s24, 1
      %p193 = por %p191, %p192
      %p195 = scmp.ne.s32.totalorder %s178, %s194
      %p196 = scmp.eq.s32.totalorder %s24, 0
      %p197 = por %p195, %p196
      %p198 = scmp.le.s32.totalorder 1, %s18
      %p199 = scmp.lt.s32.totalorder %s18, 3
      %p200 = pnand %p198, %p199
      %p201 = pneg %p200
      // Predicated region
      $region9: #{tpu_custom_call.1} parent=5 // pred_check
        _
      $region10: #{tpu_custom_call.1} parent=5 // pred_check_branch
        %203 = sbr.rel (%p200) target = $region12
      $region11: #{tpu_custom_call.1} parent=5 // pred_region
        %s204 = ssub.s32 %s18, 1
        // Predicated region
        $region13: #{tpu_custom_call.1} parent=11 // pred_check
          %p205 = pneg %p143
        $region14: #{tpu_custom_call.1} parent=11 // pred_check_branch
          %207 = sbr.rel (%p205) target = $region16
        $region15: #{tpu_custom_call.1} parent=11 // pred_region
          _
        $region16: #{tpu_custom_call.1} parent=11 // pred_fallthru
          _
        // Predicated region
        $region17: #{tpu_custom_call.1} parent=11 // pred_check
          %p208 = pneg %p164
        $region18: #{tpu_custom_call.1} parent=11 // pred_check_branch
          %210 = sbr.rel (%p208) target = $region20
        $region19: #{tpu_custom_call.1} parent=11 // pred_region
          _
        $region20: #{tpu_custom_call.1} parent=11 // pred_fallthru
          _
      $region12: #{tpu_custom_call.1} parent=5 // pred_fallthru
        _
      %p211 = scmp.lt.s32.totalorder %s18, 2
      // Predicated region
      $region21: #{tpu_custom_call.1} parent=5 // pred_check
        %p212 = pneg %p211
      $region22: #{tpu_custom_call.1} parent=5 // pred_check_branch
        %214 = sbr.rel (%p212) target = $region24
      $region23: #{tpu_custom_call.1} parent=5 // pred_region
        // Predicated region
        $region25: #{tpu_custom_call.1} parent=23 // pred_check
          %p215 = pneg %p38
        $region26: #{tpu_custom_call.1} parent=23 // pred_check_branch
          %217 = sbr.rel (%p215) target = $region28
        $region27: #{tpu_custom_call.1} parent=23 // pred_region
          %p218 = scmp.lt.s32.totalorder %s18, 1
          %s219 = scalar_select %p218, %s18, 1
          %s220 = smul.addr %s219, 9
          %s221 = scalar_lea.vmem %s0, %s220
        $region28: #{tpu_custom_call.1} parent=23 // pred_fallthru
          _
        // Predicated region
        $region29: #{tpu_custom_call.1} parent=23 // pred_check
          %p222 = pneg %p64
        $region30: #{tpu_custom_call.1} parent=23 // pred_check_branch
          %224 = sbr.rel (%p222) target = $region32
        $region31: #{tpu_custom_call.1} parent=23 // pred_region
          %p225 = scmp.lt.s32.totalorder %s18, 1
          %s226 = scalar_select %p225, %s18, 1
          %s227 = smul.addr %s226, 9
          %s228 = scalar_lea.vmem %s1, %s227
        $region32: #{tpu_custom_call.1} parent=23 // pred_fallthru
          _
        // Predicated region
        $region33: #{tpu_custom_call.1} parent=23 // pred_check
          %p229 = pneg %p90
        $region34: #{tpu_custom_call.1} parent=23 // pred_check_branch
          %231 = sbr.rel (%p229) target = $region36
        $region35: #{tpu_custom_call.1} parent=23 // pred_region
          %p232 = scmp.lt.s32.totalorder %s18, 1
          %s233 = scalar_select %p232, %s18, 1
          %s234 = smul.addr %s233, 8
          %s235 = scalar_lea.vmem %s2, %s234
        $region36: #{tpu_custom_call.1} parent=23 // pred_fallthru
          _
        // Predicated region
        $region37: #{tpu_custom_call.1} parent=23 // pred_check
          %p236 = pneg %p116
        $region38: #{tpu_custom_call.1} parent=23 // pred_check_branch
          %238 = sbr.rel (%p236) target = $region40
        $region39: #{tpu_custom_call.1} parent=23 // pred_region
          %s239 = sand.u32 %s106, 1
          %s240 = scalar_lea.sflag [#allocation4], %s239
          %s241 = sand.u32 %s106, 1
          %s242 = smul.addr %s241, 8
          %s243 = scalar_lea.vmem [#allocation3], %s242
          %s245 = ssub.s32 128, 128
          %246 = vsyncadd %s240, %s245
          %s247 = smul.addr %s18, 8
          %s248 = smul.addr %s247, 16
          %s249 = scalar_lea.hbm %s3, %s248
          %s250 = sshll.u32 %s243, 4
          %s251 = int_to_ptr.vmem [resolvable:$true] %s250
          %256 = dma.hbm_to_vmem [thread:$0]  %s249, 128, %s251, %s240, 16, 16, 1
        $region40: #{tpu_custom_call.1} parent=23 // pred_fallthru
          _
      $region24: #{tpu_custom_call.1} parent=5 // pred_fallthru
        _
      %p257 = scmp.le.s32.totalorder 1, %s18
      %p258 = scmp.lt.s32.totalorder %s18, 3
      %p259 = pnand %p257, %p258
      %p260 = pneg %p259
      // Predicated region
      $region41: #{tpu_custom_call.1} parent=5 // pred_check
        _
      $region42: #{tpu_custom_call.1} parent=5 // pred_check_branch
        %262 = sbr.rel (%p259) target = $region44
      $region43: #{tpu_custom_call.1} parent=5 // pred_region
        %s263 = ssub.s32 %s18, 1
        %s264 = sand.u32 %s109, 1
        %s265 = scalar_lea.sflag [#allocation4], %s264
        %s266 = sand.u32 %s109, 1
        %s267 = smul.addr %s266, 8
        %s268 = scalar_lea.vmem [#allocation3], %s267
        // Predicated region
        $region45: #{tpu_custom_call.1} parent=43 // pred_check
          %p269 = pneg %p122
        $region46: #{tpu_custom_call.1} parent=43 // pred_check_branch
          %271 = sbr.rel (%p269) target = $region48
        $region47: #{tpu_custom_call.1} parent=43 // pred_region
          %272 = dma.done %s265, 128
        $region48: #{tpu_custom_call.1} parent=43 // pred_fallthru
          _
        %p273 = scmp.lt.s32.totalorder %s23, 1
        %s274 = scalar_select %p273, %s23, 1
        %s275 = smul.addr %s274, 9
        %s276 = scalar_lea.vmem %s0, %s275
        %p277 = pneg %p44
        %p278 = pneg %p41
        %p279 = scmp.lt.s32.totalorder %s23, 1
        %s280 = scalar_select %p279, %s23, 1
        %s281 = smul.addr %s280, 9
        %s282 = scalar_lea.vmem %s1, %s281
        %p283 = pneg %p70
        %p284 = pneg %p67
        %p285 = scmp.lt.s32.totalorder %s23, 1
        %s286 = scalar_select %p285, %s23, 1
        %s287 = smul.addr %s286, 8
        %s288 = scalar_lea.vmem %s2, %s287
        %p289 = pneg %p96
        %p290 = pneg %p93
        %s291 = sand.u32 %s109, 1
        %s292 = scalar_lea.sflag [#allocation4], %s291
        %s293 = sand.u32 %s109, 1
        %s294 = smul.addr %s293, 8
        %s295 = scalar_lea.vmem [#allocation3], %s294
        %p296 = pneg %p122
        %p297 = pneg %p119
        %p298 = pneg %p143
        %p299 = pneg %p140
        %p300 = pneg %p164
        %p301 = pneg %p161
        %p302 = pneg %p190
        %p303 = pneg %p187
        %s304 = sand.u32 %s177, 1
        %s305 = scalar_lea.sflag [#allocation5], %s304
        %s306 = sand.u32 %s177, 1
        %s307 = smul.addr %s306, 32
        %s308 = scalar_lea.vmem [#allocation6], %s307
        %p309 = scmp.lt.s32.totalorder %s23, 1
        %s310 = scalar_select %p309, %s23, 1
        %s311 = smul.addr %s310, 9
        %s312 = scalar_lea.vmem %s0, %s311
        %p313 = scmp.lt.s32.totalorder %s23, 1
        %s314 = scalar_select %p313, %s23, 1
        %s315 = smul.addr %s314, 9
        %s316 = scalar_lea.vmem %s1, %s315
        %p317 = scmp.lt.s32.totalorder %s23, 1
        %s318 = scalar_select %p317, %s23, 1
        %s319 = smul.addr %s318, 8
        %s320 = scalar_lea.vmem %s2, %s319
        %v322 = vld [vmem:[%s312] sm:$0x1]
        %v323 = vld [vmem:[%s312 + $0x1] sm:$0x1]
        %v324 = vld [vmem:[%s312 + $0x2] sm:$0x1]
        %v325 = vld [vmem:[%s312 + $0x3] sm:$0x1]
        %v326 = vld [vmem:[%s312 + $0x4] sm:$0x1]
        %v327 = vld [vmem:[%s312 + $0x5] sm:$0x1]
        %v328 = vld [vmem:[%s312 + $0x6] sm:$0x1]
        %v329 = vld [vmem:[%s312 + $0x7] sm:$0x1]
        %vm330 = vcmask 57344
        %331 = vst.msk [vmem:[#allocation2] sm:$0x1] %vm330, %v322
        %332 = vst.msk [vmem:[#allocation2 + $0x10] sm:$0x1] %vm330, %v323
        %333 = vst.msk [vmem:[#allocation2 + $0x20] sm:$0x1] %vm330, %v324
        %334 = vst.msk [vmem:[#allocation2 + $0x30] sm:$0x1] %vm330, %v325
        %335 = vst.msk [vmem:[#allocation2 + $0x40] sm:$0x1] %vm330, %v326
        %336 = vst.msk [vmem:[#allocation2 + $0x50] sm:$0x1] %vm330, %v327
        %337 = vst.msk [vmem:[#allocation2 + $0x60] sm:$0x1] %vm330, %v328
        %338 = vst.msk [vmem:[#allocation2 + $0x70] sm:$0x1] %vm330, %v329
        %v339 = vld [vmem:[%s316] sm:$0x1]
        %v340 = vld [vmem:[%s316 + $0x1] sm:$0x1]
        %v341 = vld [vmem:[%s316 + $0x2] sm:$0x1]
        %v342 = vld [vmem:[%s316 + $0x3] sm:$0x1]
        %v343 = vld [vmem:[%s316 + $0x4] sm:$0x1]
        %v344 = vld [vmem:[%s316 + $0x5] sm:$0x1]
        %v345 = vld [vmem:[%s316 + $0x6] sm:$0x1]
        %v346 = vld [vmem:[%s316 + $0x7] sm:$0x1]
        %347 = vst.msk [vmem:[#allocation2 + $0x1] sm:$0x1] %vm330, %v339
        %348 = vst.msk [vmem:[#allocation2 + $0x11] sm:$0x1] %vm330, %v340
        %349 = vst.msk [vmem:[#allocation2 + $0x21] sm:$0x1] %vm330, %v341
        %350 = vst.msk [vmem:[#allocation2 + $0x31] sm:$0x1] %vm330, %v342
        %351 = vst.msk [vmem:[#allocation2 + $0x41] sm:$0x1] %vm330, %v343
        %352 = vst.msk [vmem:[#allocation2 + $0x51] sm:$0x1] %vm330, %v344
        %353 = vst.msk [vmem:[#allocation2 + $0x61] sm:$0x1] %vm330, %v345
        %354 = vst.msk [vmem:[#allocation2 + $0x71] sm:$0x1] %vm330, %v346
        %v355 = vld [vmem:[%s312] sm:$0x1]
        %v356 = vld [vmem:[%s312 + $0x1] sm:$0x1]
        %v357 = vld [vmem:[%s312 + $0x2] sm:$0x1]
        %v358 = vld [vmem:[%s312 + $0x3] sm:$0x1]
        %v359 = vld [vmem:[%s312 + $0x4] sm:$0x1]
        %v360 = vld [vmem:[%s312 + $0x5] sm:$0x1]
        %v361 = vld [vmem:[%s312 + $0x6] sm:$0x1]
        %v362 = vld [vmem:[%s312 + $0x7] sm:$0x1]
        %v371 = vlaneseq
        %v372 = vshrl.u32 %v371, 7
        %v373 = vsub.s32 0, %v372
        %v374 = vrot.slane %v355, %v373
        %v375 = vlaneseq
        %v376 = vshrl.u32 %v375, 7
        %v377 = vsub.s32 0, %v376
        %v378 = vrot.slane %v356, %v377
        %v379 = vlaneseq
        %v380 = vshrl.u32 %v379, 7
        %v381 = vsub.s32 0, %v380
        %v382 = vrot.slane %v357, %v381
        %v383 = vlaneseq
        %v384 = vshrl.u32 %v383, 7
        %v385 = vsub.s32 0, %v384
        %v386 = vrot.slane %v358, %v385
        %v387 = vlaneseq
        %v388 = vshrl.u32 %v387, 7
        %v389 = vsub.s32 0, %v388
        %v390 = vrot.slane %v359, %v389
        %v391 = vlaneseq
        %v392 = vshrl.u32 %v391, 7
        %v393 = vsub.s32 0, %v392
        %v394 = vrot.slane %v360, %v393
        %v395 = vlaneseq
        %v396 = vshrl.u32 %v395, 7
        %v397 = vsub.s32 0, %v396
        %v398 = vrot.slane %v361, %v397
        %v399 = vlaneseq
        %v400 = vshrl.u32 %v399, 7
        %v401 = vsub.s32 0, %v400
        %v402 = vrot.slane %v362, %v401
        %403 = vrot.lane.b32.xlu0 %v374, 127
        %v404 = vpop.permute.xlu0 %403
        %405 = vrot.lane.b32.xlu0 %v378, 127
        %v406 = vpop.permute.xlu0 %405
        %407 = vrot.lane.b32.xlu0 %v382, 127
        %v408 = vpop.permute.xlu0 %407
        %409 = vrot.lane.b32.xlu0 %v386, 127
        %v410 = vpop.permute.xlu0 %409
        %411 = vrot.lane.b32.xlu0 %v390, 127
        %v412 = vpop.permute.xlu0 %411
        %413 = vrot.lane.b32.xlu0 %v394, 127
        %v414 = vpop.permute.xlu0 %413
        %415 = vrot.lane.b32.xlu0 %v398, 127
        %v416 = vpop.permute.xlu0 %415
        %417 = vrot.lane.b32.xlu0 %v402, 127
        %v418 = vpop.permute.xlu0 %417
        %427 = vst.msk [vmem:[#allocation2 + $0x2] sm:$0x1] %vm330, %v404
        %428 = vst.msk [vmem:[#allocation2 + $0x12] sm:$0x1] %vm330, %v406
        %429 = vst.msk [vmem:[#allocation2 + $0x22] sm:$0x1] %vm330, %v408
        %430 = vst.msk [vmem:[#allocation2 + $0x32] sm:$0x1] %vm330, %v410
        %431 = vst.msk [vmem:[#allocation2 + $0x42] sm:$0x1] %vm330, %v412
        %432 = vst.msk [vmem:[#allocation2 + $0x52] sm:$0x1] %vm330, %v414
        %433 = vst.msk [vmem:[#allocation2 + $0x62] sm:$0x1] %vm330, %v416
        %434 = vst.msk [vmem:[#allocation2 + $0x72] sm:$0x1] %vm330, %v418
        %v435 = vld [vmem:[%s320] sm:$0x1]
        %v436 = vld [vmem:[%s320 + $0x1] sm:$0x1]
        %v437 = vld [vmem:[%s320 + $0x2] sm:$0x1]
        %v438 = vld [vmem:[%s320 + $0x3] sm:$0x1]
        %v439 = vld [vmem:[%s320 + $0x4] sm:$0x1]
        %v440 = vld [vmem:[%s320 + $0x5] sm:$0x1]
        %v441 = vld [vmem:[%s320 + $0x6] sm:$0x1]
        %v442 = vld [vmem:[%s320 + $0x7] sm:$0x1]
        %443 = vst.msk [vmem:[#allocation2 + $0x3] sm:$0x1] %vm330, %v435
        %444 = vst.msk [vmem:[#allocation2 + $0x13] sm:$0x1] %vm330, %v436
        %445 = vst.msk [vmem:[#allocation2 + $0x23] sm:$0x1] %vm330, %v437
        %446 = vst.msk [vmem:[#allocation2 + $0x33] sm:$0x1] %vm330, %v438
        %447 = vst.msk [vmem:[#allocation2 + $0x43] sm:$0x1] %vm330, %v439
        %448 = vst.msk [vmem:[#allocation2 + $0x53] sm:$0x1] %vm330, %v440
        %449 = vst.msk [vmem:[#allocation2 + $0x63] sm:$0x1] %vm330, %v441
        %450 = vst.msk [vmem:[#allocation2 + $0x73] sm:$0x1] %vm330, %v442
        %v451 = vld [vmem:[%s268] sm:$0x1]
        %v452 = vld [vmem:[%s268 + $0x1] sm:$0x1]
        %v453 = vld [vmem:[%s268 + $0x2] sm:$0x1]
        %v454 = vld [vmem:[%s268 + $0x3] sm:$0x1]
        %v455 = vld [vmem:[%s268 + $0x4] sm:$0x1]
        %v456 = vld [vmem:[%s268 + $0x5] sm:$0x1]
        %v457 = vld [vmem:[%s268 + $0x6] sm:$0x1]
        %v458 = vld [vmem:[%s268 + $0x7] sm:$0x1]
        %459 = vst.msk [vmem:[#allocation2 + $0x4] sm:$0x1] %vm330, %v451
        %460 = vst.msk [vmem:[#allocation2 + $0x14] sm:$0x1] %vm330, %v452
        %461 = vst.msk [vmem:[#allocation2 + $0x24] sm:$0x1] %vm330, %v453
        %462 = vst.msk [vmem:[#allocation2 + $0x34] sm:$0x1] %vm330, %v454
        %463 = vst.msk [vmem:[#allocation2 + $0x44] sm:$0x1] %vm330, %v455
        %464 = vst.msk [vmem:[#allocation2 + $0x54] sm:$0x1] %vm330, %v456
        %465 = vst.msk [vmem:[#allocation2 + $0x64] sm:$0x1] %vm330, %v457
        %466 = vst.msk [vmem:[#allocation2 + $0x74] sm:$0x1] %vm330, %v458
        %v467 = vld [vmem:[%s320] sm:$0x1]
        %v468 = vld [vmem:[%s320 + $0x1] sm:$0x1]
        %v469 = vld [vmem:[%s320 + $0x2] sm:$0x1]
        %v470 = vld [vmem:[%s320 + $0x3] sm:$0x1]
        %v471 = vld [vmem:[%s320 + $0x4] sm:$0x1]
        %v472 = vld [vmem:[%s320 + $0x5] sm:$0x1]
        %v473 = vld [vmem:[%s320 + $0x6] sm:$0x1]
        %v474 = vld [vmem:[%s320 + $0x7] sm:$0x1]
        %v483 = vlaneseq
        %v484 = vshrl.u32 %v483, 7
        %v485 = vsub.s32 0, %v484
        %v486 = vrot.slane %v467, %v485
        %v487 = vlaneseq
        %v488 = vshrl.u32 %v487, 7
        %v489 = vsub.s32 0, %v488
        %v490 = vrot.slane %v468, %v489
        %v491 = vlaneseq
        %v492 = vshrl.u32 %v491, 7
        %v493 = vsub.s32 0, %v492
        %v494 = vrot.slane %v469, %v493
        %v495 = vlaneseq
        %v496 = vshrl.u32 %v495, 7
        %v497 = vsub.s32 0, %v496
        %v498 = vrot.slane %v470, %v497
        %v499 = vlaneseq
        %v500 = vshrl.u32 %v499, 7
        %v501 = vsub.s32 0, %v500
        %v502 = vrot.slane %v471, %v501
        %v503 = vlaneseq
        %v504 = vshrl.u32 %v503, 7
        %v505 = vsub.s32 0, %v504
        %v506 = vrot.slane %v472, %v505
        %v507 = vlaneseq
        %v508 = vshrl.u32 %v507, 7
        %v509 = vsub.s32 0, %v508
        %v510 = vrot.slane %v473, %v509
        %v511 = vlaneseq
        %v512 = vshrl.u32 %v511, 7
        %v513 = vsub.s32 0, %v512
        %v514 = vrot.slane %v474, %v513
        %515 = vrot.lane.b32.xlu0 %v486, 127
        %v516 = vpop.permute.xlu0 %515
        %517 = vrot.lane.b32.xlu0 %v490, 127
        %v518 = vpop.permute.xlu0 %517
        %519 = vrot.lane.b32.xlu0 %v494, 127
        %v520 = vpop.permute.xlu0 %519
        %521 = vrot.lane.b32.xlu0 %v498, 127
        %v522 = vpop.permute.xlu0 %521
        %523 = vrot.lane.b32.xlu0 %v502, 127
        %v524 = vpop.permute.xlu0 %523
        %525 = vrot.lane.b32.xlu0 %v506, 127
        %v526 = vpop.permute.xlu0 %525
        %527 = vrot.lane.b32.xlu0 %v510, 127
        %v528 = vpop.permute.xlu0 %527
        %529 = vrot.lane.b32.xlu0 %v514, 127
        %v530 = vpop.permute.xlu0 %529
        %539 = vst.msk [vmem:[#allocation2 + $0x5] sm:$0x1] %vm330, %v516
        %540 = vst.msk [vmem:[#allocation2 + $0x15] sm:$0x1] %vm330, %v518
        %541 = vst.msk [vmem:[#allocation2 + $0x25] sm:$0x1] %vm330, %v520
        %542 = vst.msk [vmem:[#allocation2 + $0x35] sm:$0x1] %vm330, %v522
        %543 = vst.msk [vmem:[#allocation2 + $0x45] sm:$0x1] %vm330, %v524
        %544 = vst.msk [vmem:[#allocation2 + $0x55] sm:$0x1] %vm330, %v526
        %545 = vst.msk [vmem:[#allocation2 + $0x65] sm:$0x1] %vm330, %v528
        %546 = vst.msk [vmem:[#allocation2 + $0x75] sm:$0x1] %vm330, %v530
        %s547 = scalar_lea.vmem %s312, 1
        %v548 = vld [vmem:[%s547] sm:$0x1]
        %v549 = vld [vmem:[%s547 + $0x1] sm:$0x1]
        %v550 = vld [vmem:[%s547 + $0x2] sm:$0x1]
        %v551 = vld [vmem:[%s547 + $0x3] sm:$0x1]
        %v552 = vld [vmem:[%s547 + $0x4] sm:$0x1]
        %v553 = vld [vmem:[%s547 + $0x5] sm:$0x1]
        %v554 = vld [vmem:[%s547 + $0x6] sm:$0x1]
        %v555 = vld [vmem:[%s547 + $0x7] sm:$0x1]
        %556 = vst.msk [vmem:[#allocation2 + $0x6] sm:$0x1] %vm330, %v548
        %557 = vst.msk [vmem:[#allocation2 + $0x16] sm:$0x1] %vm330, %v549
        %558 = vst.msk [vmem:[#allocation2 + $0x26] sm:$0x1] %vm330, %v550
        %559 = vst.msk [vmem:[#allocation2 + $0x36] sm:$0x1] %vm330, %v551
        %560 = vst.msk [vmem:[#allocation2 + $0x46] sm:$0x1] %vm330, %v552
        %561 = vst.msk [vmem:[#allocation2 + $0x56] sm:$0x1] %vm330, %v553
        %562 = vst.msk [vmem:[#allocation2 + $0x66] sm:$0x1] %vm330, %v554
        %563 = vst.msk [vmem:[#allocation2 + $0x76] sm:$0x1] %vm330, %v555
        %s564 = scalar_lea.vmem %s316, 1
        %v565 = vld [vmem:[%s564] sm:$0x1]
        %v566 = vld [vmem:[%s564 + $0x1] sm:$0x1]
        %v567 = vld [vmem:[%s564 + $0x2] sm:$0x1]
        %v568 = vld [vmem:[%s564 + $0x3] sm:$0x1]
        %v569 = vld [vmem:[%s564 + $0x4] sm:$0x1]
        %v570 = vld [vmem:[%s564 + $0x5] sm:$0x1]
        %v571 = vld [vmem:[%s564 + $0x6] sm:$0x1]
        %v572 = vld [vmem:[%s564 + $0x7] sm:$0x1]
        %573 = vst.msk [vmem:[#allocation2 + $0x7] sm:$0x1] %vm330, %v565
        %574 = vst.msk [vmem:[#allocation2 + $0x17] sm:$0x1] %vm330, %v566
        %575 = vst.msk [vmem:[#allocation2 + $0x27] sm:$0x1] %vm330, %v567
        %576 = vst.msk [vmem:[#allocation2 + $0x37] sm:$0x1] %vm330, %v568
        %577 = vst.msk [vmem:[#allocation2 + $0x47] sm:$0x1] %vm330, %v569
        %578 = vst.msk [vmem:[#allocation2 + $0x57] sm:$0x1] %vm330, %v570
        %579 = vst.msk [vmem:[#allocation2 + $0x67] sm:$0x1] %vm330, %v571
        %580 = vst.msk [vmem:[#allocation2 + $0x77] sm:$0x1] %vm330, %v572
        %v581 = vld [vmem:[%s547] sm:$0x1]
        %v582 = vld [vmem:[%s547 + $0x1] sm:$0x1]
        %v583 = vld [vmem:[%s547 + $0x2] sm:$0x1]
        %v584 = vld [vmem:[%s547 + $0x3] sm:$0x1]
        %v585 = vld [vmem:[%s547 + $0x4] sm:$0x1]
        %v586 = vld [vmem:[%s547 + $0x5] sm:$0x1]
        %v587 = vld [vmem:[%s547 + $0x6] sm:$0x1]
        %v588 = vld [vmem:[%s547 + $0x7] sm:$0x1]
        %v597 = vlaneseq
        %v598 = vshrl.u32 %v597, 7
        %v599 = vsub.s32 0, %v598
        %v600 = vrot.slane %v581, %v599
        %v601 = vlaneseq
        %v602 = vshrl.u32 %v601, 7
        %v603 = vsub.s32 0, %v602
        %v604 = vrot.slane %v582, %v603
        %v605 = vlaneseq
        %v606 = vshrl.u32 %v605, 7
        %v607 = vsub.s32 0, %v606
        %v608 = vrot.slane %v583, %v607
        %v609 = vlaneseq
        %v610 = vshrl.u32 %v609, 7
        %v611 = vsub.s32 0, %v610
        %v612 = vrot.slane %v584, %v611
        %v613 = vlaneseq
        %v614 = vshrl.u32 %v613, 7
        %v615 = vsub.s32 0, %v614
        %v616 = vrot.slane %v585, %v615
        %v617 = vlaneseq
        %v618 = vshrl.u32 %v617, 7
        %v619 = vsub.s32 0, %v618
        %v620 = vrot.slane %v586, %v619
        %v621 = vlaneseq
        %v622 = vshrl.u32 %v621, 7
        %v623 = vsub.s32 0, %v622
        %v624 = vrot.slane %v587, %v623
        %v625 = vlaneseq
        %v626 = vshrl.u32 %v625, 7
        %v627 = vsub.s32 0, %v626
        %v628 = vrot.slane %v588, %v627
        %629 = vrot.lane.b32.xlu0 %v600, 127
        %v630 = vpop.permute.xlu0 %629
        %631 = vrot.lane.b32.xlu0 %v604, 127
        %v632 = vpop.permute.xlu0 %631
        %633 = vrot.lane.b32.xlu0 %v608, 127
        %v634 = vpop.permute.xlu0 %633
        %635 = vrot.lane.b32.xlu0 %v612, 127
        %v636 = vpop.permute.xlu0 %635
        %637 = vrot.lane.b32.xlu0 %v616, 127
        %v638 = vpop.permute.xlu0 %637
        %639 = vrot.lane.b32.xlu0 %v620, 127
        %v640 = vpop.permute.xlu0 %639
        %641 = vrot.lane.b32.xlu0 %v624, 127
        %v642 = vpop.permute.xlu0 %641
        %643 = vrot.lane.b32.xlu0 %v628, 127
        %v644 = vpop.permute.xlu0 %643
        %653 = vst.msk [vmem:[#allocation2 + $0x8] sm:$0x1] %vm330, %v630
        %654 = vst.msk [vmem:[#allocation2 + $0x18] sm:$0x1] %vm330, %v632
        %655 = vst.msk [vmem:[#allocation2 + $0x28] sm:$0x1] %vm330, %v634
        %656 = vst.msk [vmem:[#allocation2 + $0x38] sm:$0x1] %vm330, %v636
        %657 = vst.msk [vmem:[#allocation2 + $0x48] sm:$0x1] %vm330, %v638
        %658 = vst.msk [vmem:[#allocation2 + $0x58] sm:$0x1] %vm330, %v640
        %659 = vst.msk [vmem:[#allocation2 + $0x68] sm:$0x1] %vm330, %v642
        %660 = vst.msk [vmem:[#allocation2 + $0x78] sm:$0x1] %vm330, %v644
        %v661 = vld [vmem:[%s4] sm:$0x3]
        %v662 = vld [vmem:[%s5] sm:$0xf]
        %v663 = vld [vmem:[#allocation2] sm:$0xff]
        %v664 = vld [vmem:[#allocation2 + $0x8] sm:$0x1]
        %v665 = vpack.c.bf16 %v664, %v663
        %667 = vset.pattern.permute.xlu0 0
        %668 = vperm.xlu0 %667, %v662
        %v669 = vpop.permute.xlu0 %668
        %vm671 = vcmask 72704
        %v673 = vsel %vm671, %v661, 0
        %vm675 = vcmask 1043456
        %vm676 = vcmask 1044480
        %v677 = vsel %vm675, 4294967295, 65535
        %v678 = vsel %vm676, %v677, 0
        %v680 = vand.u32 %v665, %v678
        %682 = vmatprep.subr.bf16.mxu0 0
        %683 = vmatpush1.bf16.msra.mxu0 0
        %684 = vmatprep.subr.bf16.mxu0 0
        %685 = vmatpush1.bf16.msra.mxu0 0
        %686 = vmatprep.subr.bf16.mxu0 0
        %687 = vmatpush1.bf16.msra.mxu0 0
        %688 = vmatprep.subr.bf16.mxu0 0
        %689 = vmatpush1.bf16.msra.mxu0 0
        %690 = vmatprep.subr.bf16.mxu0 0
        %691 = vmatpush1.bf16.msra.mxu0 0
        %692 = vmatprep.subr.bf16.mxu0 0
        %693 = vmatpush1.bf16.msra.mxu0 0
        %694 = vmatprep.subr.bf16.mxu0 0
        %695 = vmatpush1.bf16.msra.mxu0 0
        %696 = vmatprep.subr.bf16.mxu0 0
        %697 = vmatpush1.bf16.msra.mxu0 %v680
        %698 = vmatprep.subr.bf16.mxu0 0
        %699 = vmatpush2.bf16.msra.mxu0 0
        %700 = vmatprep.subr.bf16.mxu0 0
        %701 = vmatpush2.bf16.msra.mxu0 0
        %702 = vmatprep.subr.bf16.mxu0 0
        %703 = vmatpush2.bf16.msra.mxu0 0
        %704 = vmatprep.subr.bf16.mxu0 0
        %705 = vmatpush2.bf16.msra.mxu0 0
        %706 = vmatprep.subr.bf16.mxu0 0
        %707 = vmatpush2.bf16.msra.mxu0 0
        %708 = vmatprep.subr.bf16.mxu0 0
        %709 = vmatpush2.bf16.msra.mxu0 0
        %710 = vmatprep.subr.bf16.mxu0 0
        %711 = vmatpush2.bf16.msra.mxu0 0
        %712 = vmatprep.subr.bf16.mxu0 0
        %713 = vmatpush2.bf16.msra.mxu0 0
        %714 = vmatprep.mubr.bf16.mxu0 0
        %715 = vmatmul.mubr.bf16.gmra.mxu0 %v673
        %v716 = vpop.f32.mrf.mxu0
        %v717 = vadd.f32 %v669, %v716
        %v718 = vpop.f32.mrf.mxu0
        %v719 = vpop.f32.mrf.mxu0
        %v720 = vpop.f32.mrf.mxu0
        %721 = vdwg.mxu0
        %v722 = vmax.f32 %v717, 0.0
        %vm723 = vcmask 60416
        %724 = vst.msk [vmem:[%s308] sm:$0xf] %vm723, %v722
        %s725 = scalar_lea.vmem [#allocation2], 16
        %v726 = vld [vmem:[%s725] sm:$0xff]
        %v727 = vld [vmem:[%s725 + $0x8] sm:$0x1]
        %v728 = vpack.c.bf16 %v727, %v726
        %v730 = vand.u32 %v728, %v678
        %732 = vmatprep.subr.bf16.mxu0 0
        %733 = vmatpush1.bf16.msra.mxu0 0
        %734 = vmatprep.subr.bf16.mxu0 0
        %735 = vmatpush1.bf16.msra.mxu0 0
        %736 = vmatprep.subr.bf16.mxu0 0
        %737 = vmatpush1.bf16.msra.mxu0 0
        %738 = vmatprep.subr.bf16.mxu0 0
        %739 = vmatpush1.bf16.msra.mxu0 0
        %740 = vmatprep.subr.bf16.mxu0 0
        %741 = vmatpush1.bf16.msra.mxu0 0
        %742 = vmatprep.subr.bf16.mxu0 0
        %743 = vmatpush1.bf16.msra.mxu0 0
        %744 = vmatprep.subr.bf16.mxu0 0
        %745 = vmatpush1.bf16.msra.mxu0 0
        %746 = vmatprep.subr.bf16.mxu0 0
        %747 = vmatpush1.bf16.msra.mxu0 %v730
        %748 = vmatprep.subr.bf16.mxu0 0
        %749 = vmatpush2.bf16.msra.mxu0 0
        %750 = vmatprep.subr.bf16.mxu0 0
        %751 = vmatpush2.bf16.msra.mxu0 0
        %752 = vmatprep.subr.bf16.mxu0 0
        %753 = vmatpush2.bf16.msra.mxu0 0
        %754 = vmatprep.subr.bf16.mxu0 0
        %755 = vmatpush2.bf16.msra.mxu0 0
        %756 = vmatprep.subr.bf16.mxu0 0
        %757 = vmatpush2.bf16.msra.mxu0 0
        %758 = vmatprep.subr.bf16.mxu0 0
        %759 = vmatpush2.bf16.msra.mxu0 0
        %760 = vmatprep.subr.bf16.mxu0 0
        %761 = vmatpush2.bf16.msra.mxu0 0
        %762 = vmatprep.subr.bf16.mxu0 0
        %763 = vmatpush2.bf16.msra.mxu0 0
        %764 = vmatprep.mubr.bf16.mxu0 0
        %765 = vmatmul.mubr.bf16.gmra.mxu0 %v673
        %v766 = vpop.f32.mrf.mxu0
        %v767 = vadd.f32 %v669, %v766
        %v768 = vpop.f32.mrf.mxu0
        %v769 = vpop.f32.mrf.mxu0
        %v770 = vpop.f32.mrf.mxu0
        %771 = vdwg.mxu0
        %v772 = vmax.f32 %v767, 0.0
        %s773 = scalar_lea.vmem %s308, 4 [#allocation6]
        %774 = vst.msk [vmem:[%s773] sm:$0xf] %vm723, %v772
        %s775 = scalar_lea.vmem [#allocation2], 32
        %v776 = vld [vmem:[%s775] sm:$0xff]
        %v777 = vld [vmem:[%s775 + $0x8] sm:$0x1]
        %v778 = vpack.c.bf16 %v777, %v776
        %v780 = vand.u32 %v778, %v678
        %782 = vmatprep.subr.bf16.mxu0 0
        %783 = vmatpush1.bf16.msra.mxu0 0
        %784 = vmatprep.subr.bf16.mxu0 0
        %785 = vmatpush1.bf16.msra.mxu0 0
        %786 = vmatprep.subr.bf16.mxu0 0
        %787 = vmatpush1.bf16.msra.mxu0 0
        %788 = vmatprep.subr.bf16.mxu0 0
        %789 = vmatpush1.bf16.msra.mxu0 0
        %790 = vmatprep.subr.bf16.mxu0 0
        %791 = vmatpush1.bf16.msra.mxu0 0
        %792 = vmatprep.subr.bf16.mxu0 0
        %793 = vmatpush1.bf16.msra.mxu0 0
        %794 = vmatprep.subr.bf16.mxu0 0
        %795 = vmatpush1.bf16.msra.mxu0 0
        %796 = vmatprep.subr.bf16.mxu0 0
        %797 = vmatpush1.bf16.msra.mxu0 %v780
        %798 = vmatprep.subr.bf16.mxu0 0
        %799 = vmatpush2.bf16.msra.mxu0 0
        %800 = vmatprep.subr.bf16.mxu0 0
        %801 = vmatpush2.bf16.msra.mxu0 0
        %802 = vmatprep.subr.bf16.mxu0 0
        %803 = vmatpush2.bf16.msra.mxu0 0
        %804 = vmatprep.subr.bf16.mxu0 0
        %805 = vmatpush2.bf16.msra.mxu0 0
        %806 = vmatprep.subr.bf16.mxu0 0
        %807 = vmatpush2.bf16.msra.mxu0 0
        %808 = vmatprep.subr.bf16.mxu0 0
        %809 = vmatpush2.bf16.msra.mxu0 0
        %810 = vmatprep.subr.bf16.mxu0 0
        %811 = vmatpush2.bf16.msra.mxu0 0
        %812 = vmatprep.subr.bf16.mxu0 0
        %813 = vmatpush2.bf16.msra.mxu0 0
        %814 = vmatprep.mubr.bf16.mxu0 0
        %815 = vmatmul.mubr.bf16.gmra.mxu0 %v673
        %v816 = vpop.f32.mrf.mxu0
        %v817 = vadd.f32 %v669, %v816
        %v818 = vpop.f32.mrf.mxu0
        %v819 = vpop.f32.mrf.mxu0
        %v820 = vpop.f32.mrf.mxu0
        %821 = vdwg.mxu0
        %v822 = vmax.f32 %v817, 0.0
        %s823 = scalar_lea.vmem %s308, 8 [#allocation6]
        %824 = vst.msk [vmem:[%s823] sm:$0xf] %vm723, %v822
        %s825 = scalar_lea.vmem [#allocation2], 48
        %v826 = vld [vmem:[%s825] sm:$0xff]
        %v827 = vld [vmem:[%s825 + $0x8] sm:$0x1]
        %v828 = vpack.c.bf16 %v827, %v826
        %v830 = vand.u32 %v828, %v678
        %832 = vmatprep.subr.bf16.mxu0 0
        %833 = vmatpush1.bf16.msra.mxu0 0
        %834 = vmatprep.subr.bf16.mxu0 0
        %835 = vmatpush1.bf16.msra.mxu0 0
        %836 = vmatprep.subr.bf16.mxu0 0
        %837 = vmatpush1.bf16.msra.mxu0 0
        %838 = vmatprep.subr.bf16.mxu0 0
        %839 = vmatpush1.bf16.msra.mxu0 0
        %840 = vmatprep.subr.bf16.mxu0 0
        %841 = vmatpush1.bf16.msra.mxu0 0
        %842 = vmatprep.subr.bf16.mxu0 0
        %843 = vmatpush1.bf16.msra.mxu0 0
        %844 = vmatprep.subr.bf16.mxu0 0
        %845 = vmatpush1.bf16.msra.mxu0 0
        %846 = vmatprep.subr.bf16.mxu0 0
        %847 = vmatpush1.bf16.msra.mxu0 %v830
        %848 = vmatprep.subr.bf16.mxu0 0
        %849 = vmatpush2.bf16.msra.mxu0 0
        %850 = vmatprep.subr.bf16.mxu0 0
        %851 = vmatpush2.bf16.msra.mxu0 0
        %852 = vmatprep.subr.bf16.mxu0 0
        %853 = vmatpush2.bf16.msra.mxu0 0
        %854 = vmatprep.subr.bf16.mxu0 0
        %855 = vmatpush2.bf16.msra.mxu0 0
        %856 = vmatprep.subr.bf16.mxu0 0
        %857 = vmatpush2.bf16.msra.mxu0 0
        %858 = vmatprep.subr.bf16.mxu0 0
        %859 = vmatpush2.bf16.msra.mxu0 0
        %860 = vmatprep.subr.bf16.mxu0 0
        %861 = vmatpush2.bf16.msra.mxu0 0
        %862 = vmatprep.subr.bf16.mxu0 0
        %863 = vmatpush2.bf16.msra.mxu0 0
        %864 = vmatprep.mubr.bf16.mxu0 0
        %865 = vmatmul.mubr.bf16.gmra.mxu0 %v673
        %v866 = vpop.f32.mrf.mxu0
        %v867 = vadd.f32 %v669, %v866
        %v868 = vpop.f32.mrf.mxu0
        %v869 = vpop.f32.mrf.mxu0
        %v870 = vpop.f32.mrf.mxu0
        %871 = vdwg.mxu0
        %v872 = vmax.f32 %v867, 0.0
        %s873 = scalar_lea.vmem %s308, 12 [#allocation6]
        %874 = vst.msk [vmem:[%s873] sm:$0xf] %vm723, %v872
        %s875 = scalar_lea.vmem [#allocation2], 64
        %v876 = vld [vmem:[%s875] sm:$0xff]
        %v877 = vld [vmem:[%s875 + $0x8] sm:$0x1]
        %v878 = vpack.c.bf16 %v877, %v876
        %v880 = vand.u32 %v878, %v678
        %882 = vmatprep.subr.bf16.mxu0 0
        %883 = vmatpush1.bf16.msra.mxu0 0
        %884 = vmatprep.subr.bf16.mxu0 0
        %885 = vmatpush1.bf16.msra.mxu0 0
        %886 = vmatprep.subr.bf16.mxu0 0
        %887 = vmatpush1.bf16.msra.mxu0 0
        %888 = vmatprep.subr.bf16.mxu0 0
        %889 = vmatpush1.bf16.msra.mxu0 0
        %890 = vmatprep.subr.bf16.mxu0 0
        %891 = vmatpush1.bf16.msra.mxu0 0
        %892 = vmatprep.subr.bf16.mxu0 0
        %893 = vmatpush1.bf16.msra.mxu0 0
        %894 = vmatprep.subr.bf16.mxu0 0
        %895 = vmatpush1.bf16.msra.mxu0 0
        %896 = vmatprep.subr.bf16.mxu0 0
        %897 = vmatpush1.bf16.msra.mxu0 %v880
        %898 = vmatprep.subr.bf16.mxu0 0
        %899 = vmatpush2.bf16.msra.mxu0 0
        %900 = vmatprep.subr.bf16.mxu0 0
        %901 = vmatpush2.bf16.msra.mxu0 0
        %902 = vmatprep.subr.bf16.mxu0 0
        %903 = vmatpush2.bf16.msra.mxu0 0
        %904 = vmatprep.subr.bf16.mxu0 0
        %905 = vmatpush2.bf16.msra.mxu0 0
        %906 = vmatprep.subr.bf16.mxu0 0
        %907 = vmatpush2.bf16.msra.mxu0 0
        %908 = vmatprep.subr.bf16.mxu0 0
        %909 = vmatpush2.bf16.msra.mxu0 0
        %910 = vmatprep.subr.bf16.mxu0 0
        %911 = vmatpush2.bf16.msra.mxu0 0
        %912 = vmatprep.subr.bf16.mxu0 0
        %913 = vmatpush2.bf16.msra.mxu0 0
        %914 = vmatprep.mubr.bf16.mxu0 0
        %915 = vmatmul.mubr.bf16.gmra.mxu0 %v673
        %v916 = vpop.f32.mrf.mxu0
        %v917 = vadd.f32 %v669, %v916
        %v918 = vpop.f32.mrf.mxu0
        %v919 = vpop.f32.mrf.mxu0
        %v920 = vpop.f32.mrf.mxu0
        %921 = vdwg.mxu0
        %v922 = vmax.f32 %v917, 0.0
        %s923 = scalar_lea.vmem %s308, 16 [#allocation6]
        %924 = vst.msk [vmem:[%s923] sm:$0xf] %vm723, %v922
        %s925 = scalar_lea.vmem [#allocation2], 80
        %v926 = vld [vmem:[%s925] sm:$0xff]
        %v927 = vld [vmem:[%s925 + $0x8] sm:$0x1]
        %v928 = vpack.c.bf16 %v927, %v926
        %v930 = vand.u32 %v928, %v678
        %932 = vmatprep.subr.bf16.mxu0 0
        %933 = vmatpush1.bf16.msra.mxu0 0
        %934 = vmatprep.subr.bf16.mxu0 0
        %935 = vmatpush1.bf16.msra.mxu0 0
        %936 = vmatprep.subr.bf16.mxu0 0
        %937 = vmatpush1.bf16.msra.mxu0 0
        %938 = vmatprep.subr.bf16.mxu0 0
        %939 = vmatpush1.bf16.msra.mxu0 0
        %940 = vmatprep.subr.bf16.mxu0 0
        %941 = vmatpush1.bf16.msra.mxu0 0
        %942 = vmatprep.subr.bf16.mxu0 0
        %943 = vmatpush1.bf16.msra.mxu0 0
        %944 = vmatprep.subr.bf16.mxu0 0
        %945 = vmatpush1.bf16.msra.mxu0 0
        %946 = vmatprep.subr.bf16.mxu0 0
        %947 = vmatpush1.bf16.msra.mxu0 %v930
        %948 = vmatprep.subr.bf16.mxu0 0
        %949 = vmatpush2.bf16.msra.mxu0 0
        %950 = vmatprep.subr.bf16.mxu0 0
        %951 = vmatpush2.bf16.msra.mxu0 0
        %952 = vmatprep.subr.bf16.mxu0 0
        %953 = vmatpush2.bf16.msra.mxu0 0
        %954 = vmatprep.subr.bf16.mxu0 0
        %955 = vmatpush2.bf16.msra.mxu0 0
        %956 = vmatprep.subr.bf16.mxu0 0
        %957 = vmatpush2.bf16.msra.mxu0 0
        %958 = vmatprep.subr.bf16.mxu0 0
        %959 = vmatpush2.bf16.msra.mxu0 0
        %960 = vmatprep.subr.bf16.mxu0 0
        %961 = vmatpush2.bf16.msra.mxu0 0
        %962 = vmatprep.subr.bf16.mxu0 0
        %963 = vmatpush2.bf16.msra.mxu0 0
        %964 = vmatprep.mubr.bf16.mxu0 0
        %965 = vmatmul.mubr.bf16.gmra.mxu0 %v673
        %v966 = vpop.f32.mrf.mxu0
        %v967 = vadd.f32 %v669, %v966
        %v968 = vpop.f32.mrf.mxu0
        %v969 = vpop.f32.mrf.mxu0
        %v970 = vpop.f32.mrf.mxu0
        %971 = vdwg.mxu0
        %v972 = vmax.f32 %v967, 0.0
        %s973 = scalar_lea.vmem %s308, 20 [#allocation6]
        %974 = vst.msk [vmem:[%s973] sm:$0xf] %vm723, %v972
        %s975 = scalar_lea.vmem [#allocation2], 96
        %v976 = vld [vmem:[%s975] sm:$0xff]
        %v977 = vld [vmem:[%s975 + $0x8] sm:$0x1]
        %v978 = vpack.c.bf16 %v977, %v976
        %v980 = vand.u32 %v978, %v678
        %982 = vmatprep.subr.bf16.mxu0 0
        %983 = vmatpush1.bf16.msra.mxu0 0
        %984 = vmatprep.subr.bf16.mxu0 0
        %985 = vmatpush1.bf16.msra.mxu0 0
        %986 = vmatprep.subr.bf16.mxu0 0
        %987 = vmatpush1.bf16.msra.mxu0 0
        %988 = vmatprep.subr.bf16.mxu0 0
        %989 = vmatpush1.bf16.msra.mxu0 0
        %990 = vmatprep.subr.bf16.mxu0 0
        %991 = vmatpush1.bf16.msra.mxu0 0
        %992 = vmatprep.subr.bf16.mxu0 0
        %993 = vmatpush1.bf16.msra.mxu0 0
        %994 = vmatprep.subr.bf16.mxu0 0
        %995 = vmatpush1.bf16.msra.mxu0 0
        %996 = vmatprep.subr.bf16.mxu0 0
        %997 = vmatpush1.bf16.msra.mxu0 %v980
        %998 = vmatprep.subr.bf16.mxu0 0
        %999 = vmatpush2.bf16.msra.mxu0 0
        %1000 = vmatprep.subr.bf16.mxu0 0
        %1001 = vmatpush2.bf16.msra.mxu0 0
        %1002 = vmatprep.subr.bf16.mxu0 0
        %1003 = vmatpush2.bf16.msra.mxu0 0
        %1004 = vmatprep.subr.bf16.mxu0 0
        %1005 = vmatpush2.bf16.msra.mxu0 0
        %1006 = vmatprep.subr.bf16.mxu0 0
        %1007 = vmatpush2.bf16.msra.mxu0 0
        %1008 = vmatprep.subr.bf16.mxu0 0
        %1009 = vmatpush2.bf16.msra.mxu0 0
        %1010 = vmatprep.subr.bf16.mxu0 0
        %1011 = vmatpush2.bf16.msra.mxu0 0
        %1012 = vmatprep.subr.bf16.mxu0 0
        %1013 = vmatpush2.bf16.msra.mxu0 0
        %1014 = vmatprep.mubr.bf16.mxu0 0
        %1015 = vmatmul.mubr.bf16.gmra.mxu0 %v673
        %v1016 = vpop.f32.mrf.mxu0
        %v1017 = vadd.f32 %v669, %v1016
        %v1018 = vpop.f32.mrf.mxu0
        %v1019 = vpop.f32.mrf.mxu0
        %v1020 = vpop.f32.mrf.mxu0
        %1021 = vdwg.mxu0
        %v1022 = vmax.f32 %v1017, 0.0
        %s1023 = scalar_lea.vmem %s308, 24 [#allocation6]
        %1024 = vst.msk [vmem:[%s1023] sm:$0xf] %vm723, %v1022
        %s1025 = scalar_lea.vmem [#allocation2], 112
        %v1026 = vld [vmem:[%s1025] sm:$0xff]
        %v1027 = vld [vmem:[%s1025 + $0x8] sm:$0x1]
        %v1028 = vpack.c.bf16 %v1027, %v1026
        %v1030 = vand.u32 %v1028, %v678
        %1032 = vmatprep.subr.bf16.mxu0 0
        %1033 = vmatpush1.bf16.msra.mxu0 0
        %1034 = vmatprep.subr.bf16.mxu0 0
        %1035 = vmatpush1.bf16.msra.mxu0 0
        %1036 = vmatprep.subr.bf16.mxu0 0
        %1037 = vmatpush1.bf16.msra.mxu0 0
        %1038 = vmatprep.subr.bf16.mxu0 0
        %1039 = vmatpush1.bf16.msra.mxu0 0
        %1040 = vmatprep.subr.bf16.mxu0 0
        %1041 = vmatpush1.bf16.msra.mxu0 0
        %1042 = vmatprep.subr.bf16.mxu0 0
        %1043 = vmatpush1.bf16.msra.mxu0 0
        %1044 = vmatprep.subr.bf16.mxu0 0
        %1045 = vmatpush1.bf16.msra.mxu0 0
        %1046 = vmatprep.subr.bf16.mxu0 0
        %1047 = vmatpush1.bf16.msra.mxu0 %v1030
        %1048 = vmatprep.subr.bf16.mxu0 0
        %1049 = vmatpush2.bf16.msra.mxu0 0
        %1050 = vmatprep.subr.bf16.mxu0 0
        %1051 = vmatpush2.bf16.msra.mxu0 0
        %1052 = vmatprep.subr.bf16.mxu0 0
        %1053 = vmatpush2.bf16.msra.mxu0 0
        %1054 = vmatprep.subr.bf16.mxu0 0
        %1055 = vmatpush2.bf16.msra.mxu0 0
        %1056 = vmatprep.subr.bf16.mxu0 0
        %1057 = vmatpush2.bf16.msra.mxu0 0
        %1058 = vmatprep.subr.bf16.mxu0 0
        %1059 = vmatpush2.bf16.msra.mxu0 0
        %1060 = vmatprep.subr.bf16.mxu0 0
        %1061 = vmatpush2.bf16.msra.mxu0 0
        %1062 = vmatprep.subr.bf16.mxu0 0
        %1063 = vmatpush2.bf16.msra.mxu0 0
        %1064 = vmatprep.mubr.bf16.mxu0 0
        %1065 = vmatmul.mubr.bf16.gmra.mxu0 %v673
        %v1066 = vpop.f32.mrf.mxu0
        %v1067 = vadd.f32 %v669, %v1066
        %v1068 = vpop.f32.mrf.mxu0
        %v1069 = vpop.f32.mrf.mxu0
        %v1070 = vpop.f32.mrf.mxu0
        %1071 = vdwg.mxu0
        %v1072 = vmax.f32 %v1067, 0.0
        %s1073 = scalar_lea.vmem %s308, 28 [#allocation6]
        %1074 = vst.msk [vmem:[%s1073] sm:$0xf] %vm723, %v1072
        %s1075 = sand.u32 %s177, 1
        %s1076 = scalar_lea.sflag [#allocation5], %s1075
        %s1077 = sand.u32 %s177, 1
        %s1078 = smul.addr %s1077, 32
        %s1079 = scalar_lea.vmem [#allocation6], %s1078
        // Predicated region
        $region49: #{tpu_custom_call.1} parent=43 // pred_check
          %p1080 = pneg %p187
        $region50: #{tpu_custom_call.1} parent=43 // pred_check_branch
          %1082 = sbr.rel (%p1080) target = $region52
        $region51: #{tpu_custom_call.1} parent=43 // pred_region
          %s1084 = ssub.s32 512, 512
          %1085 = vsyncadd %s1076, %s1084
          %s1086 = smul.addr %s23, 8
          %s1087 = smul.addr %s1086, 64
          %s1088 = scalar_lea.hbm %s6, %s1087
          %s1089 = sshll.u32 %s1079, 4
          %s1090 = int_to_ptr.vmem [resolvable:$true] %s1089
          %1095 = dma.vmem_to_hbm [thread:$0]  %s1090, 512, %s1088, %s1076, 64, 64, 4
        $region52: #{tpu_custom_call.1} parent=43 // pred_fallthru
          _
      $region44: #{tpu_custom_call.1} parent=5 // pred_fallthru
        _
      %p1096 = scmp.le.s32.totalorder 2, %s18
      // Predicated region
      $region53: #{tpu_custom_call.1} parent=5 // pred_check
        %p1097 = pneg %p1096
      $region54: #{tpu_custom_call.1} parent=5 // pred_check_branch
        %1099 = sbr.rel (%p1097) target = $region56
      $region55: #{tpu_custom_call.1} parent=5 // pred_region
        %s1100 = ssub.s32 %s18, 2
        // Predicated region
        $region57: #{tpu_custom_call.1} parent=55 // pred_check
          %p1101 = pneg %p193
        $region58: #{tpu_custom_call.1} parent=55 // pred_check_branch
          %1103 = sbr.rel (%p1101) target = $region60
        $region59: #{tpu_custom_call.1} parent=55 // pred_region
          %s1104 = sand.u32 %s178, 1
          %s1105 = scalar_lea.sflag [#allocation5], %s1104
          %s1106 = sand.u32 %s178, 1
          %s1107 = smul.addr %s1106, 32
          %s1108 = scalar_lea.vmem [#allocation6], %s1107
          %1109 = dma.done %s1105, 512
        $region60: #{tpu_custom_call.1} parent=55 // pred_fallthru
          _
      $region56: #{tpu_custom_call.1} parent=5 // pred_fallthru
        _
    $region6: #{tpu_custom_call.1} parent=1 // loop_footer
      %s22 = sadd.s32 1, %s18
    $region7: #{tpu_custom_call.1} parent=1 // loop_footer_branch
      %17 = sbr.rel target = $region3
    $region8: #{tpu_custom_call.1} parent=1 // loop_exit
      _
    %1110 = vsyncpa [#allocation4], 1
    %s1111 = scalar_lea.sflag [#allocation4], 1
    %1112 = vsyncpa %s1111, 1
    %1113 = vsyncpa [#allocation5], 1
    %s1114 = scalar_lea.sflag [#allocation5], 1
    %1115 = vsyncpa %s1114, 1

</llo_original>
